<compile_context>
chip_gen: v5e
topology: v5e:2x2
jax: 0.10.0
libtpu: 0.0.40
codegen_flags: <defaults>
</compile_context>

<pallas_src>
import functools

import jax
import jax.numpy as jnp
from jax.experimental import pallas as pl
from jax.experimental.pallas import tpu as pltpu


def _round_up(x, m):
    return (x + m - 1) // m * m


def _vae_kernel(
    x_ref, eps_ref,
    w_e1_ref, b_e1_ref,
    w_e2_ref, b_e2_ref,
    w_head_ref, b_head_ref,      # fused [mu | logvar] head, each half padded to LATENT_PAD lanes
    w_d1_ref, b_d1_ref,
    w_d2_ref, b_d2_ref,
    w_d3_ref, b_d3_ref,
    recon_ref, mulv_ref,
    *, latent_pad, compute_dtype,
):
    relu = lambda v: jnp.maximum(v, 0.0)

    def dense(v, w_ref, b_ref):
        # Matmul inputs in compute_dtype (f32 or bf16), f32 accumulation + f32 bias.
        return jnp.dot(v, w_ref[...].astype(compute_dtype),
                       preferred_element_type=jnp.float32) + b_ref[...]

    x = x_ref[...].astype(compute_dtype)

    # ---- encoder: Linear -> ReLU -> Linear -> ReLU (h2 lane-padded to 128) ----
    h1 = relu(dense(x, w_e1_ref, b_e1_ref)).astype(compute_dtype)
    h2 = relu(dense(h1, w_e2_ref, b_e2_ref)).astype(compute_dtype)

    # ---- fused mu/logvar head: single (TB, 2*LATENT_PAD) matmul, lane-dense output ----
    head = dense(h2, w_head_ref, b_head_ref)            # f32, (TB, 2*latent_pad)
    mu = head[:, :latent_pad]
    logvar = head[:, latent_pad:]

    # ---- reparameterize (f32): z = mu + eps * exp(0.5 * logvar) ----
    # Padded latent lanes: logvar = 0, eps = 0 -> z = 0; w_d1 has zero rows there anyway.
    z = mu + eps_ref[...] * jnp.exp(0.5 * logvar)

    # ---- decoder: Linear -> ReLU -> Linear -> ReLU -> Linear -> Sigmoid ----
    d1 = relu(dense(z.astype(compute_dtype), w_d1_ref, b_d1_ref)).astype(compute_dtype)
    d2 = relu(dense(d1, w_d2_ref, b_d2_ref)).astype(compute_dtype)
    recon = jax.nn.sigmoid(dense(d2, w_d3_ref, b_d3_ref))

    recon_ref[...] = recon.astype(recon_ref.dtype)
    mulv_ref[...] = head.astype(mulv_ref.dtype)          # lane-dense (TB, 2*latent_pad) store


def prepare_vae_params(params, *, use_bf16=False):
    """One-time weight packing: fused/padded head, h2 padded to 128, optional bf16 cast.

    Call once and reuse the result across forward calls (keeps packing off the hot path).
    """
    input_dim, hidden_dim = params["w_e1"].shape
    h2_dim = params["w_e2"].shape[1]
    latent_dim = params["w_mu"].shape[1]

    lp = _round_up(max(latent_dim, 8), 64)     # 64 for latent_dim <= 64 (was 128 before)
    h2p = _round_up(h2_dim, 128)               # pad h2 so every matmul K/N is a 128 multiple
    w_dtype = jnp.bfloat16 if use_bf16 else jnp.float32

    # Encoder layer 2: pad output columns to h2p (zero cols + zero bias -> relu(0) = 0).
    w_e2 = jnp.zeros((hidden_dim, h2p), jnp.float32).at[:, :h2_dim].set(params["w_e2"])
    b_e2 = jnp.zeros((1, h2p), jnp.float32).at[:, :h2_dim].set(params["b_e2"][0])

    # Fused mu/logvar head: rows padded to h2p (zero), cols [0:latent)=mu, [lp:lp+latent)=logvar.
    w_head = jnp.zeros((h2p, 2 * lp), jnp.float32)
    w_head = w_head.at[:h2_dim, :latent_dim].set(params["w_mu"])
    w_head = w_head.at[:h2_dim, lp:lp + latent_dim].set(params["w_lv"])
    b_head = jnp.zeros((1, 2 * lp), jnp.float32)
    b_head = b_head.at[:, :latent_dim].set(params["b_mu"][0])
    b_head = b_head.at[:, lp:lp + latent_dim].set(params["b_lv"][0])
    # NOTE: padded-lane biases MUST stay exactly zero so z's padded lanes are zero.

    # Decoder layer 1: zero rows for padded latent lanes of z, output columns padded to h2p.
    w_d1 = jnp.zeros((lp, h2p), jnp.float32).at[:latent_dim, :h2_dim].set(params["w_d1"])
    b_d1 = jnp.zeros((1, h2p), jnp.float32).at[:, :h2_dim].set(params["b_d1"][0])

    # Decoder layer 2: zero rows for padded h2 lanes of d1.
    w_d2 = jnp.zeros((h2p, hidden_dim), jnp.float32).at[:h2_dim, :].set(params["w_d2"])

    wc = lambda w: w.astype(w_dtype)   # bf16 halves resident weight footprint/DMA; biases stay f32

    return dict(
        w_e1=wc(params["w_e1"]), b_e1=params["b_e1"],
        w_e2=wc(w_e2), b_e2=b_e2,
        w_head=wc(w_head), b_head=b_head,
        w_d1=wc(w_d1), b_d1=b_d1,
        w_d2=wc(w_d2), b_d2=params["b_d2"],
        w_d3=wc(params["w_d3"]), b_d3=params["b_d3"],
        input_dim=input_dim, latent_dim=latent_dim,
        latent_pad=lp, h2_pad=h2p, use_bf16=use_bf16,
    )


def vae_forward(x, prep, eps, *, block_batch=128):
    """VAE forward in a single batch-gridded Pallas call. Returns (recon, mu, logvar).

    `prep` is the output of prepare_vae_params(). `eps` is the externally drawn standard
    normal noise (batch, latent_dim), matching torch.randn_like in reparameterize.
    """
    batch, input_dim = x.shape
    latent_dim = prep["latent_dim"]
    lp = prep["latent_pad"]
    compute_dtype = jnp.bfloat16 if prep["use_bf16"] else jnp.float32
    # NOTE: prefer use_bf16=True on v6e/v7x (bf16 MXU throughput); use_bf16=False on v5e
    # (no bf16 VPU, so the per-layer activation casts are extra VALU work).

    # Batch tiling: TB rows per grid step (multiple of 8). For real v7x workloads size TB
    # so the grid has >= 2 steps per TensorCore to keep input DMA overlapped with compute.
    tb = min(block_batch, _round_up(batch, 8))
    padded_batch = _round_up(batch, tb)
    need_pad = padded_batch != batch

    x_p = x if not need_pad else (
        jnp.zeros((padded_batch, input_dim), x.dtype).at[:batch].set(x))
    # eps lane-padded to lp (zero in padded lanes); batch-padded only if needed.
    # TODO(synk): eps could be generated in-kernel (pltpu.prng_seed + stateful_normal) to
    # drop this input stream entirely if bit-parity with an external randn is not required.
    eps_p = jnp.zeros((padded_batch, lp), jnp.float32).at[:batch, :latent_dim].set(eps)

    inputs = (
        x_p, eps_p,
        prep["w_e1"], prep["b_e1"],
        prep["w_e2"], prep["b_e2"],
        prep["w_head"], prep["b_head"],
        prep["w_d1"], prep["b_d1"],
        prep["w_d2"], prep["b_d2"],
        prep["w_d3"], prep["b_d3"],
    )

    def row_spec(cols):                       # batch-tiled arrays
        return pl.BlockSpec((tb, cols), lambda i: (i, 0))

    def resident(arr):                        # weights/biases resident across grid steps
        return pl.BlockSpec(arr.shape, lambda i: (0, 0))

    in_specs = [row_spec(input_dim), row_spec(lp)] + [resident(a) for a in inputs[2:]]
    out_specs = (row_spec(input_dim), row_spec(2 * lp))
    out_shapes = (
        jax.ShapeDtypeStruct((padded_batch, input_dim), jnp.float32),   # recon_x
        jax.ShapeDtypeStruct((padded_batch, 2 * lp), jnp.float32),      # [mu | logvar] slab
    )

    kernel = functools.partial(_vae_kernel, latent_pad=lp, compute_dtype=compute_dtype)

    recon_p, mulv_p = pl.pallas_call(
        kernel,
        out_shape=out_shapes,
        grid=(padded_batch // tb,),
        in_specs=in_specs,
        out_specs=out_specs,
        compiler_params=pltpu.CompilerParams(
            dimension_semantics=("parallel",),       # megacore sharding on v7x
            vmem_limit_bytes=16 * 1024 * 1024,       # actual usage ~1-2 MiB; v7x-safe budget
        ),
    )(*inputs)

    recon = recon_p if not need_pad else recon_p[:batch]
    mu = mulv_p[:batch, :latent_dim]
    logvar = mulv_p[:batch, lp:lp + latent_dim]
    return recon, mu, logvar


def init_vae_params(key, input_dim, hidden_dim, latent_dim):
    """Deterministic synthetic parameters (PyTorch-equivalent shapes, stored as (in, out))."""
    def linear(k, fan_in, fan_out):
        kw, kb = jax.random.split(k)
        scale = 1.0 / jnp.sqrt(fan_in)
        w = jax.random.uniform(kw, (fan_in, fan_out), jnp.float32, -scale, scale)
        b = jax.random.uniform(kb, (1, fan_out), jnp.float32, -scale, scale)
        return w, b

    h2 = hidden_dim // 2
    keys = jax.random.split(key, 7)
    w_e1, b_e1 = linear(keys[0], input_dim, hidden_dim)
    w_e2, b_e2 = linear(keys[1], hidden_dim, h2)
    w_mu, b_mu = linear(keys[2], h2, latent_dim)
    w_lv, b_lv = linear(keys[3], h2, latent_dim)
    w_d1, b_d1 = linear(keys[4], latent_dim, h2)
    w_d2, b_d2 = linear(keys[5], h2, hidden_dim)
    w_d3, b_d3 = linear(keys[6], hidden_dim, input_dim)
    return dict(
        w_e1=w_e1, b_e1=b_e1, w_e2=w_e2, b_e2=b_e2,
        w_mu=w_mu, b_mu=b_mu, w_lv=w_lv, b_lv=b_lv,
        w_d1=w_d1, b_d1=b_d1, w_d2=w_d2, b_d2=b_d2,
        w_d3=w_d3, b_d3=b_d3,
    )


def vae_reference(x, params, eps, compute_dtype=jnp.float32):
    """Pure-JAX reference of the same forward pass (matmul inputs in compute_dtype)."""
    relu = lambda v: jnp.maximum(v, 0.0)

    def dense(v, w, b):
        return jnp.dot(v.astype(compute_dtype), w.astype(compute_dtype),
                       preferred_element_type=jnp.float32) + b

    h = relu(dense(x, params["w_e1"], params["b_e1"]))
    h = relu(dense(h, params["w_e2"], params["b_e2"]))
    mu = dense(h, params["w_mu"], params["b_mu"])
    logvar = dense(h, params["w_lv"], params["b_lv"])
    z = mu + eps * jnp.exp(0.5 * logvar)
    d = relu(dense(z, params["w_d1"], params["b_d1"]))
    d = relu(dense(d, params["w_d2"], params["b_d2"]))
    recon = jax.nn.sigmoid(dense(d, params["w_d3"], params["b_d3"]))
    return recon, mu, logvar


if __name__ == "__main__":
    # Small shapes consistent with the module (input_dim = 10*10 + country_features + 5).
    batch = 256          # 2 grid steps of 128 rows; batch % TB == 0 so no pad copies
    input_dim = 128      # stand-in for 100 + country_features + 5
    hidden_dim = 128     # nn.Linear default in the module's constructor
    latent_dim = 20

    key = jax.random.PRNGKey(0)
    k_params, k_x, k_eps = jax.random.split(key, 3)

    params = init_vae_params(k_params, input_dim, hidden_dim, latent_dim)
    x = jax.random.uniform(k_x, (batch, input_dim), jnp.float32)
    # eps is the torch.randn_like draw in reparameterize; generated deterministically here
    # and fed to the kernel so the kernel math matches the reference exactly.
    eps = jax.random.normal(k_eps, (batch, latent_dim), jnp.float32)

    # ---- f32 matmul path (matches the PyTorch-f32 semantics) ----
    prep_f32 = prepare_vae_params(params, use_bf16=False)
    recon, mu, logvar = jax.block_until_ready(
        vae_forward(x, prep_f32, eps, block_batch=128))
    recon_r, mu_r, logvar_r = vae_reference(x, params, eps, jnp.float32)
    assert jnp.allclose(recon, recon_r, atol=2e-4, rtol=2e-4)
    assert jnp.allclose(mu, mu_r, atol=2e-4, rtol=2e-4)
    assert jnp.allclose(logvar, logvar_r, atol=2e-4, rtol=2e-4)

    # ---- bf16 matmul path (f32 accumulation, f32 exp/sigmoid); preferred on v6e/v7x ----
    prep_bf16 = prepare_vae_params(params, use_bf16=True)
    recon_b, mu_b, logvar_b = jax.block_until_ready(
        vae_forward(x, prep_bf16, eps, block_batch=128))
    recon_rb, mu_rb, logvar_rb = vae_reference(x, params, eps, jnp.bfloat16)
    assert jnp.allclose(recon_b, recon_rb, atol=5e-3, rtol=5e-3)
    assert jnp.allclose(mu_b, mu_rb, atol=5e-3, rtol=5e-3)
    assert jnp.allclose(logvar_b, logvar_rb, atol=5e-3, rtol=5e-3)

    print("KERNEL_OK")
</pallas_src>

<mosaic_0001>
module attributes {stable_mosaic.version = 11 : i64} {
  func.func @_vae_kernel(%arg0: i32, %arg1: memref<128x128xf32, #tpu.memory_space<vmem>>, %arg2: memref<128x64xf32, #tpu.memory_space<vmem>>, %arg3: memref<128x128xf32, #tpu.memory_space<vmem>>, %arg4: memref<1x128xf32, #tpu.memory_space<vmem>>, %arg5: memref<128x128xf32, #tpu.memory_space<vmem>>, %arg6: memref<1x128xf32, #tpu.memory_space<vmem>>, %arg7: memref<128x128xf32, #tpu.memory_space<vmem>>, %arg8: memref<1x128xf32, #tpu.memory_space<vmem>>, %arg9: memref<64x128xf32, #tpu.memory_space<vmem>>, %arg10: memref<1x128xf32, #tpu.memory_space<vmem>>, %arg11: memref<128x128xf32, #tpu.memory_space<vmem>>, %arg12: memref<1x128xf32, #tpu.memory_space<vmem>>, %arg13: memref<128x128xf32, #tpu.memory_space<vmem>>, %arg14: memref<1x128xf32, #tpu.memory_space<vmem>>, %arg15: memref<128x128xf32, #tpu.memory_space<vmem>>, %arg16: memref<128x128xf32, #tpu.memory_space<vmem>>) attributes {dimension_semantics = [#tpu.dimension_semantics<parallel>], iteration_bounds = array<i64: 2>, scalar_prefetch = 0 : i64, scratch_operands = 0 : i64, tpu.core_type = #tpu.core_type<tc>, window_params = [{transform_indices = @transform_0, window_bounds = array<i64: 128, 128>}, {transform_indices = @transform_1, window_bounds = array<i64: 128, 64>}, {pipeline_mode = #tpu.pipeline_mode<synchronous>, transform_indices = @transform_2, window_bounds = array<i64: 128, 128>}, {pipeline_mode = #tpu.pipeline_mode<synchronous>, transform_indices = @transform_3, window_bounds = array<i64: 1, 128>}, {pipeline_mode = #tpu.pipeline_mode<synchronous>, transform_indices = @transform_4, window_bounds = array<i64: 128, 128>}, {pipeline_mode = #tpu.pipeline_mode<synchronous>, transform_indices = @transform_5, window_bounds = array<i64: 1, 128>}, {pipeline_mode = #tpu.pipeline_mode<synchronous>, transform_indices = @transform_6, window_bounds = array<i64: 128, 128>}, {pipeline_mode = #tpu.pipeline_mode<synchronous>, transform_indices = @transform_7, window_bounds = array<i64: 1, 128>}, {pipeline_mode = #tpu.pipeline_mode<synchronous>, transform_indices = @transform_8, window_bounds = array<i64: 64, 128>}, {pipeline_mode = #tpu.pipeline_mode<synchronous>, transform_indices = @transform_9, window_bounds = array<i64: 1, 128>}, {pipeline_mode = #tpu.pipeline_mode<synchronous>, transform_indices = @transform_10, window_bounds = array<i64: 128, 128>}, {pipeline_mode = #tpu.pipeline_mode<synchronous>, transform_indices = @transform_11, window_bounds = array<i64: 1, 128>}, {pipeline_mode = #tpu.pipeline_mode<synchronous>, transform_indices = @transform_12, window_bounds = array<i64: 128, 128>}, {pipeline_mode = #tpu.pipeline_mode<synchronous>, transform_indices = @transform_13, window_bounds = array<i64: 1, 128>}, {transform_indices = @transform_14, window_bounds = array<i64: 128, 128>}, {transform_indices = @transform_15, window_bounds = array<i64: 128, 128>}]} {
    %c0 = arith.constant 0 : index
    %c0_0 = arith.constant 0 : index
    %0 = vector.load %arg1[%c0, %c0_0] : memref<128x128xf32, #tpu.memory_space<vmem>>, vector<128x128xf32>
    %c0_1 = arith.constant 0 : index
    %c0_2 = arith.constant 0 : index
    %1 = vector.load %arg3[%c0_1, %c0_2] : memref<128x128xf32, #tpu.memory_space<vmem>>, vector<128x128xf32>
    %cst = arith.constant dense<0.000000e+00> : vector<128x128xf32>
    %2 = tpu.matmul %0, %1, %cst {dimension_numbers = #tpu.dot_dimension_numbers<[1], [0], [0], [1], [0, 0, 1, 1], [], []>} : vector<128x128xf32>, vector<128x128xf32>, vector<128x128xf32> -> vector<128x128xf32>
    %c0_3 = arith.constant 0 : index
    %c0_4 = arith.constant 0 : index
    %3 = vector.load %arg4[%c0_3, %c0_4] : memref<1x128xf32, #tpu.memory_space<vmem>>, vector<1x128xf32>
    %4 = vector.broadcast %3 : vector<1x128xf32> to vector<128x128xf32>
    %5 = arith.addf %2, %4 : vector<128x128xf32>
    %cst_5 = arith.constant 0.000000e+00 : f32
    %6 = vector.broadcast %cst_5 : f32 to vector<128x128xf32>
    %7 = arith.maximumf %5, %6 : vector<128x128xf32>
    %c0_6 = arith.constant 0 : index
    %c0_7 = arith.constant 0 : index
    %8 = vector.load %arg5[%c0_6, %c0_7] : memref<128x128xf32, #tpu.memory_space<vmem>>, vector<128x128xf32>
    %cst_8 = arith.constant dense<0.000000e+00> : vector<128x128xf32>
    %9 = tpu.matmul %7, %8, %cst_8 {dimension_numbers = #tpu.dot_dimension_numbers<[1], [0], [0], [1], [0, 0, 1, 1], [], []>} : vector<128x128xf32>, vector<128x128xf32>, vector<128x128xf32> -> vector<128x128xf32>
    %c0_9 = arith.constant 0 : index
    %c0_10 = arith.constant 0 : index
    %10 = vector.load %arg6[%c0_9, %c0_10] : memref<1x128xf32, #tpu.memory_space<vmem>>, vector<1x128xf32>
    %11 = vector.broadcast %10 : vector<1x128xf32> to vector<128x128xf32>
    %12 = arith.addf %9, %11 : vector<128x128xf32>
    %cst_11 = arith.constant 0.000000e+00 : f32
    %13 = vector.broadcast %cst_11 : f32 to vector<128x128xf32>
    %14 = arith.maximumf %12, %13 : vector<128x128xf32>
    %c0_12 = arith.constant 0 : index
    %c0_13 = arith.constant 0 : index
    %15 = vector.load %arg7[%c0_12, %c0_13] : memref<128x128xf32, #tpu.memory_space<vmem>>, vector<128x128xf32>
    %cst_14 = arith.constant dense<0.000000e+00> : vector<128x128xf32>
    %16 = tpu.matmul %14, %15, %cst_14 {dimension_numbers = #tpu.dot_dimension_numbers<[1], [0], [0], [1], [0, 0, 1, 1], [], []>} : vector<128x128xf32>, vector<128x128xf32>, vector<128x128xf32> -> vector<128x128xf32>
    %c0_15 = arith.constant 0 : index
    %c0_16 = arith.constant 0 : index
    %17 = vector.load %arg8[%c0_15, %c0_16] : memref<1x128xf32, #tpu.memory_space<vmem>>, vector<1x128xf32>
    %18 = vector.broadcast %17 : vector<1x128xf32> to vector<128x128xf32>
    %19 = arith.addf %16, %18 : vector<128x128xf32>
    %20 = vector.extract_strided_slice %19 {offsets = [0, 0], sizes = [128, 64], strides = [1, 1]} : vector<128x128xf32> to vector<128x64xf32>
    %21 = vector.extract_strided_slice %19 {offsets = [0, 64], sizes = [128, 64], strides = [1, 1]} : vector<128x128xf32> to vector<128x64xf32>
    %c0_17 = arith.constant 0 : index
    %c0_18 = arith.constant 0 : index
    %22 = vector.load %arg2[%c0_17, %c0_18] : memref<128x64xf32, #tpu.memory_space<vmem>>, vector<128x64xf32>
    %cst_19 = arith.constant 5.000000e-01 : f32
    %23 = vector.broadcast %cst_19 : f32 to vector<128x64xf32>
    %24 = arith.mulf %23, %21 : vector<128x64xf32>
    %25 = math.exp %24 : vector<128x64xf32>
    %26 = arith.mulf %22, %25 : vector<128x64xf32>
    %27 = arith.addf %20, %26 : vector<128x64xf32>
    %c0_20 = arith.constant 0 : index
    %c0_21 = arith.constant 0 : index
    %28 = vector.load %arg9[%c0_20, %c0_21] : memref<64x128xf32, #tpu.memory_space<vmem>>, vector<64x128xf32>
    %cst_22 = arith.constant dense<0.000000e+00> : vector<128x128xf32>
    %29 = tpu.matmul %27, %28, %cst_22 {dimension_numbers = #tpu.dot_dimension_numbers<[1], [0], [0], [1], [0, 0, 1, 1], [], []>} : vector<128x64xf32>, vector<64x128xf32>, vector<128x128xf32> -> vector<128x128xf32>
    %c0_23 = arith.constant 0 : index
    %c0_24 = arith.constant 0 : index
    %30 = vector.load %arg10[%c0_23, %c0_24] : memref<1x128xf32, #tpu.memory_space<vmem>>, vector<1x128xf32>
    %31 = vector.broadcast %30 : vector<1x128xf32> to vector<128x128xf32>
    %32 = arith.addf %29, %31 : vector<128x128xf32>
    %cst_25 = arith.constant 0.000000e+00 : f32
    %33 = vector.broadcast %cst_25 : f32 to vector<128x128xf32>
    %34 = arith.maximumf %32, %33 : vector<128x128xf32>
    %c0_26 = arith.constant 0 : index
    %c0_27 = arith.constant 0 : index
    %35 = vector.load %arg11[%c0_26, %c0_27] : memref<128x128xf32, #tpu.memory_space<vmem>>, vector<128x128xf32>
    %cst_28 = arith.constant dense<0.000000e+00> : vector<128x128xf32>
    %36 = tpu.matmul %34, %35, %cst_28 {dimension_numbers = #tpu.dot_dimension_numbers<[1], [0], [0], [1], [0, 0, 1, 1], [], []>} : vector<128x128xf32>, vector<128x128xf32>, vector<128x128xf32> -> vector<128x128xf32>
    %c0_29 = arith.constant 0 : index
    %c0_30 = arith.constant 0 : index
    %37 = vector.load %arg12[%c0_29, %c0_30] : memref<1x128xf32, #tpu.memory_space<vmem>>, vector<1x128xf32>
    %38 = vector.broadcast %37 : vector<1x128xf32> to vector<128x128xf32>
    %39 = arith.addf %36, %38 : vector<128x128xf32>
    %cst_31 = arith.constant 0.000000e+00 : f32
    %40 = vector.broadcast %cst_31 : f32 to vector<128x128xf32>
    %41 = arith.maximumf %39, %40 : vector<128x128xf32>
    %c0_32 = arith.constant 0 : index
    %c0_33 = arith.constant 0 : index
    %42 = vector.load %arg13[%c0_32, %c0_33] : memref<128x128xf32, #tpu.memory_space<vmem>>, vector<128x128xf32>
    %cst_34 = arith.constant dense<0.000000e+00> : vector<128x128xf32>
    %43 = tpu.matmul %41, %42, %cst_34 {dimension_numbers = #tpu.dot_dimension_numbers<[1], [0], [0], [1], [0, 0, 1, 1], [], []>} : vector<128x128xf32>, vector<128x128xf32>, vector<128x128xf32> -> vector<128x128xf32>
    %c0_35 = arith.constant 0 : index
    %c0_36 = arith.constant 0 : index
    %44 = vector.load %arg14[%c0_35, %c0_36] : memref<1x128xf32, #tpu.memory_space<vmem>>, vector<1x128xf32>
    %45 = vector.broadcast %44 : vector<1x128xf32> to vector<128x128xf32>
    %46 = arith.addf %43, %45 : vector<128x128xf32>
    %47 = arith.negf %46 : vector<128x128xf32>
    %48 = math.exp %47 : vector<128x128xf32>
    %cst_37 = arith.constant 1.000000e+00 : f32
    %49 = vector.broadcast %cst_37 : f32 to vector<128x128xf32>
    %50 = arith.addf %49, %48 : vector<128x128xf32>
    %51 = arith.divf %49, %50 : vector<128x128xf32>
    %c0_38 = arith.constant 0 : index
    %c0_39 = arith.constant 0 : index
    %52 = vector.load %arg15[%c0_38, %c0_39] : memref<128x128xf32, #tpu.memory_space<vmem>>, vector<128x128xf32>
    tpu.vector_store %arg15[%c0_38, %c0_39], %51 {strides = array<i32>} : memref<128x128xf32, #tpu.memory_space<vmem>>, vector<128x128xf32>,
    %c0_40 = arith.constant 0 : index
    %c0_41 = arith.constant 0 : index
    %53 = vector.load %arg16[%c0_40, %c0_41] : memref<128x128xf32, #tpu.memory_space<vmem>>, vector<128x128xf32>
    tpu.vector_store %arg16[%c0_40, %c0_41], %19 {strides = array<i32>} : memref<128x128xf32, #tpu.memory_space<vmem>>, vector<128x128xf32>,
    return
  }
  func.func @transform_0(%arg0: i32) -> (i32, i32) {
    %c0_i32 = arith.constant 0 : i32
    %c0_i32_0 = arith.constant 0 : i32
    return %arg0, %c0_i32 : i32, i32
  }
  func.func @transform_1(%arg0: i32) -> (i32, i32) {
    %c0_i32 = arith.constant 0 : i32
    %c0_i32_0 = arith.constant 0 : i32
    return %arg0, %c0_i32 : i32, i32
  }
  func.func @transform_2(%arg0: i32) -> (i32, i32) {
    %c0_i32 = arith.constant 0 : i32
    %c0_i32_0 = arith.constant 0 : i32
    %c0_i32_1 = arith.constant 0 : i32
    return %c0_i32, %c0_i32_0 : i32, i32
  }
  func.func @transform_3(%arg0: i32) -> (i32, i32) {
    %c0_i32 = arith.constant 0 : i32
    %c0_i32_0 = arith.constant 0 : i32
    %c0_i32_1 = arith.constant 0 : i32
    return %c0_i32, %c0_i32_0 : i32, i32
  }
  func.func @transform_4(%arg0: i32) -> (i32, i32) {
    %c0_i32 = arith.constant 0 : i32
    %c0_i32_0 = arith.constant 0 : i32
    %c0_i32_1 = arith.constant 0 : i32
    return %c0_i32, %c0_i32_0 : i32, i32
  }
  func.func @transform_5(%arg0: i32) -> (i32, i32) {
    %c0_i32 = arith.constant 0 : i32
    %c0_i32_0 = arith.constant 0 : i32
    %c0_i32_1 = arith.constant 0 : i32
    return %c0_i32, %c0_i32_0 : i32, i32
  }
  func.func @transform_6(%arg0: i32) -> (i32, i32) {
    %c0_i32 = arith.constant 0 : i32
    %c0_i32_0 = arith.constant 0 : i32
    %c0_i32_1 = arith.constant 0 : i32
    return %c0_i32, %c0_i32_0 : i32, i32
  }
  func.func @transform_7(%arg0: i32) -> (i32, i32) {
    %c0_i32 = arith.constant 0 : i32
    %c0_i32_0 = arith.constant 0 : i32
    %c0_i32_1 = arith.constant 0 : i32
    return %c0_i32, %c0_i32_0 : i32, i32
  }
  func.func @transform_8(%arg0: i32) -> (i32, i32) {
    %c0_i32 = arith.constant 0 : i32
    %c0_i32_0 = arith.constant 0 : i32
    %c0_i32_1 = arith.constant 0 : i32
    return %c0_i32, %c0_i32_0 : i32, i32
  }
  func.func @transform_9(%arg0: i32) -> (i32, i32) {
    %c0_i32 = arith.constant 0 : i32
    %c0_i32_0 = arith.constant 0 : i32
    %c0_i32_1 = arith.constant 0 : i32
    return %c0_i32, %c0_i32_0 : i32, i32
  }
  func.func @transform_10(%arg0: i32) -> (i32, i32) {
    %c0_i32 = arith.constant 0 : i32
    %c0_i32_0 = arith.constant 0 : i32
    %c0_i32_1 = arith.constant 0 : i32
    return %c0_i32, %c0_i32_0 : i32, i32
  }
  func.func @transform_11(%arg0: i32) -> (i32, i32) {
    %c0_i32 = arith.constant 0 : i32
    %c0_i32_0 = arith.constant 0 : i32
    %c0_i32_1 = arith.constant 0 : i32
    return %c0_i32, %c0_i32_0 : i32, i32
  }
  func.func @transform_12(%arg0: i32) -> (i32, i32) {
    %c0_i32 = arith.constant 0 : i32
    %c0_i32_0 = arith.constant 0 : i32
    %c0_i32_1 = arith.constant 0 : i32
    return %c0_i32, %c0_i32_0 : i32, i32
  }
  func.func @transform_13(%arg0: i32) -> (i32, i32) {
    %c0_i32 = arith.constant 0 : i32
    %c0_i32_0 = arith.constant 0 : i32
    %c0_i32_1 = arith.constant 0 : i32
    return %c0_i32, %c0_i32_0 : i32, i32
  }
  func.func @transform_14(%arg0: i32) -> (i32, i32) {
    %c0_i32 = arith.constant 0 : i32
    %c0_i32_0 = arith.constant 0 : i32
    return %arg0, %c0_i32 : i32, i32
  }
  func.func @transform_15(%arg0: i32) -> (i32, i32) {
    %c0_i32 = arith.constant 0 : i32
    %c0_i32_0 = arith.constant 0 : i32
    return %arg0, %c0_i32 : i32, i32
  }
}

</mosaic_0001>

<llo_original>
// kernel: tpu_custom_call.1
$region0: #{tpu_custom_call.1}
  #allocation0 [shape = 'u32[]', space=smem, size = 0x4, offset = 0x4, fixed_abs, tag = 'smem constant byte address 0x4 - core index']
  #allocation1 [shape = 'u32[72,128]{1,0:T(1,128)}', space=vmem, size = 0x9000, scoped, tag = 'internal scratch']
  %s0 = inlined_call_operand.vmem [shape: f32[256,128], index: 0, kind: input, shape index: {}]
  %s1 = inlined_call_operand.vmem [shape: f32[256,64], index: 1, kind: input, shape index: {}]
  %s2 = inlined_call_operand.vmem [shape: f32[128,128], index: 2, kind: input, shape index: {}]
  %s3 = inlined_call_operand.hbm [shape: f32[1,128], index: 3, kind: input, shape index: {}]
  %s4 = inlined_call_operand.hbm [shape: f32[128,128], index: 4, kind: input, shape index: {}]
  %s5 = inlined_call_operand.vmem [shape: f32[1,128], index: 5, kind: input, shape index: {}]
  %s6 = inlined_call_operand.hbm [shape: f32[128,128], index: 6, kind: input, shape index: {}]
  %s7 = inlined_call_operand.vmem [shape: f32[1,128], index: 7, kind: input, shape index: {}]
  %s8 = inlined_call_operand.hbm [shape: f32[64,128], index: 8, kind: input, shape index: {}]
  %s9 = inlined_call_operand.vmem [shape: f32[1,128], index: 9, kind: input, shape index: {}]
  %s10 = inlined_call_operand.hbm [shape: f32[128,128], index: 10, kind: input, shape index: {}]
  %s11 = inlined_call_operand.vmem [shape: f32[1,128], index: 11, kind: input, shape index: {}]
  %s12 = inlined_call_operand.hbm [shape: f32[128,128], index: 12, kind: input, shape index: {}]
  %s13 = inlined_call_operand.vmem [shape: f32[1,128], index: 13, kind: input, shape index: {}]
  %s14 = inlined_call_operand.hbm [shape: f32[256,128], index: 14, kind: output, shape index: {0}]
  %s15 = inlined_call_operand.hbm [shape: f32[256,128], index: 15, kind: output, shape index: {1}]
  %16 = xla_tuple %s14, %s15
  %s17 = sld [smem:[#allocation0]]
  $region121: #{tpu_custom_call.1} parent=0
    _
  %s19 = ssub.s32 1, %s17
  %s20 = scalar_select 0, %s19, %s17
  $region1: #{tpu_custom_call.1} parent=0
    #allocation2 [shape = 'u8[512]{0}', space=vmem, size = 0x400, scoped, tag = 'input window, operand 3, single buffered']
    #allocation3 [shape = 's32[2]{0}', space=sflag, size = 0x8, scoped, tag = 'scoped memory for tpu_custom_call.1']
    #allocation4 [shape = 's32[2]{0}', space=sflag, size = 0x8, scoped, tag = 'scoped memory for tpu_custom_call.1']
    #allocation5 [shape = 'u8[65536]{0}', space=vmem, size = 0x10000, scoped, tag = 'input window, operand 4, single buffered']
    #allocation6 [shape = 's32[1]{0}', space=sflag, size = 0x4, scoped, tag = 'scoped memory for tpu_custom_call.1']
    #allocation7 [shape = 'u8[65536]{0}', space=vmem, size = 0x10000, scoped, tag = 'input window, operand 6, single buffered']
    #allocation8 [shape = 'u8[32768]{0}', space=vmem, size = 0x8000, scoped, tag = 'input window, operand 8, single buffered']
    #allocation9 [shape = 's32[1]{0}', space=sflag, size = 0x4, scoped, tag = 'scoped memory for tpu_custom_call.1']
    #allocation10 [shape = 'u8[65536]{0}', space=vmem, size = 0x10000, scoped, tag = 'input window, operand 10, single buffered']
    #allocation11 [shape = 'u8[65536]{0}', space=vmem, size = 0x10000, scoped, tag = 'input window, operand 12, single buffered']
    #allocation12 [shape = 's32[1]{0}', space=sflag, size = 0x4, scoped, tag = 'scoped memory for tpu_custom_call.1']
    #allocation13 [shape = 'u8[131072]{0}', space=vmem, size = 0x20000, scoped, tag = 'output window, operand 0']
    #allocation14 [shape = 'u8[131072]{0}', space=vmem, size = 0x20000, scoped, tag = 'output window, operand 1']
    #allocation15 [shape = 's32[2]{0}', space=sflag, size = 0x8, scoped, tag = 'scoped memory for tpu_custom_call.1']
    %21 = vsyncpa [#allocation3], 0
    %22 = vsyncpa [#allocation6], 0
    %23 = vsyncpa [#allocation9], 0
    %24 = vsyncpa [#allocation12], 0
    %25 = vsyncpa [#allocation4], 0
    %s26 = scalar_lea.sflag [#allocation4], 1
    %27 = vsyncpa %s26, 0
    %28 = vsyncpa [#allocation15], 0
    %s29 = scalar_lea.sflag [#allocation15], 1
    %30 = vsyncpa %s29, 0
    loop: start=0, step=1, limit=4
    $region2: #{tpu_custom_call.1} parent=1 // loop_pre_header
      _
    $region3: #{tpu_custom_call.1} parent=1 // loop_header
      %s32 = sphi 0, %s36
      %p33 = scmp.ge.s32.totalorder %s32, 4
      %s42 = sphi 0, %s44
      %s45 = sphi 0, %s42
      %s46 = sphi 0, %s45
      %s62 = sphi 0, %s46
      %s68 = sphi 0, %s70
      %s71 = sphi 0, %s68
      %s72 = sphi 0, %s71
      %s88 = sphi 0, %s72
      %s92 = sphi 0, %s92
      %s94 = sphi 0, %s92
      %s95 = sphi 0, %s94
      %s109 = sphi 0, %s95
      %s113 = sphi 0, %s113
      %s115 = sphi 0, %s113
      %s116 = sphi 0, %s115
      %s130 = sphi 0, %s116
      %s134 = sphi 0, %s134
      %s136 = sphi 0, %s134
      %s137 = sphi 0, %s136
      %s151 = sphi 0, %s137
      %s155 = sphi 0, %s155
      %s157 = sphi 0, %s155
      %s158 = sphi 0, %s157
      %s172 = sphi 0, %s158
      %s176 = sphi 0, %s176
      %s178 = sphi 0, %s176
      %s179 = sphi 0, %s178
      %s193 = sphi 0, %s179
      %s197 = sphi 0, %s197
      %s199 = sphi 0, %s197
      %s200 = sphi 0, %s199
      %s214 = sphi 0, %s200
      %s218 = sphi 0, %s218
      %s220 = sphi 0, %s218
      %s221 = sphi 0, %s220
      %s235 = sphi 0, %s221
      %s239 = sphi 0, %s239
      %s241 = sphi 0, %s239
      %s242 = sphi 0, %s241
      %s256 = sphi 0, %s242
      %s260 = sphi 0, %s260
      %s262 = sphi 0, %s260
      %s263 = sphi 0, %s262
      %s277 = sphi 0, %s263
      %s281 = sphi 0, %s281
      %s283 = sphi 0, %s281
      %s284 = sphi 0, %s283
      %s298 = sphi 0, %s284
      %s302 = sphi 0, %s302
      %s304 = sphi 0, %s302
      %s305 = sphi 0, %s304
      %s319 = sphi 0, %s305
      %s323 = sphi 0, %s323
      %s325 = sphi 0, %s323
      %s326 = sphi 0, %s325
      %s340 = sphi 0, %s326
      %s346 = sphi 0, %s348
      %s349 = sphi 0, %s346
      %s350 = sphi 0, %s349
      %s366 = sphi 0, %s350
      %s372 = sphi 0, %s374
      %s375 = sphi 0, %s372
      %s376 = sphi 0, %s375
      %s392 = sphi 0, %s376
    $region4: #{tpu_custom_call.1} parent=1 // loop_header_branch
      %35 = sbr.rel (%p33) target = $region8
    $region5: #{tpu_custom_call.1} parent=1 // loop_body
      %s37 = ssub.s32 %s32, 1
      %s38 = ssub.s32 %s32, 2
      %s39 = sadd.s32 %s32, 1
      %s40 = ssub.s32 %s32, %s39
      %p41 = scmp.eq.s32.totalorder %s40, 0
      %s43 = sadd.s32 %s42, 1
      %s44 = scalar_select %p41, %s42, %s43
      %p47 = pneg %p41
      %p48 = scmp.eq.s32.totalorder %s32, 1
      %p49 = por %p47, %p48
      %p50 = scmp.ne.s32.totalorder %s42, %s45
      %p51 = scmp.eq.s32.totalorder %s32, 0
      %p52 = por %p50, %p51
      %p53 = scmp.ne.s32.totalorder %s42, %s45
      %p54 = scmp.eq.s32.totalorder %s37, 1
      %p55 = por %p53, %p54
      %p56 = scmp.ne.s32.totalorder %s45, %s46
      %p57 = scmp.eq.s32.totalorder %s37, 0
      %p58 = por %p56, %p57
      %p59 = scmp.ne.s32.totalorder %s45, %s46
      %p60 = scmp.eq.s32.totalorder %s38, 1
      %p61 = por %p59, %p60
      %p63 = scmp.ne.s32.totalorder %s46, %s62
      %p64 = scmp.eq.s32.totalorder %s38, 0
      %p65 = por %p63, %p64
      %s66 = ssub.s32 %s32, %s39
      %p67 = scmp.eq.s32.totalorder %s66, 0
      %s69 = sadd.s32 %s68, 1
      %s70 = scalar_select %p67, %s68, %s69
      %p73 = pneg %p67
      %p74 = scmp.eq.s32.totalorder %s32, 1
      %p75 = por %p73, %p74
      %p76 = scmp.ne.s32.totalorder %s68, %s71
      %p77 = scmp.eq.s32.totalorder %s32, 0
      %p78 = por %p76, %p77
      %p79 = scmp.ne.s32.totalorder %s68, %s71
      %p80 = scmp.eq.s32.totalorder %s37, 1
      %p81 = por %p79, %p80
      %p82 = scmp.ne.s32.totalorder %s71, %s72
      %p83 = scmp.eq.s32.totalorder %s37, 0
      %p84 = por %p82, %p83
      %p85 = scmp.ne.s32.totalorder %s71, %s72
      %p86 = scmp.eq.s32.totalorder %s38, 1
      %p87 = por %p85, %p86
      %p89 = scmp.ne.s32.totalorder %s72, %s88
      %p90 = scmp.eq.s32.totalorder %s38, 0
      %p91 = por %p89, %p90
      %s93 = sadd.s32 %s92, 1
      %p96 = scmp.eq.s32.totalorder %s32, 1
      %p97 = scmp.ne.s32.totalorder %s92, %s94
      %p98 = scmp.eq.s32.totalorder %s32, 0
      %p99 = por %p97, %p98
      %p100 = scmp.ne.s32.totalorder %s92, %s94
      %p101 = scmp.eq.s32.totalorder %s37, 1
      %p102 = por %p100, %p101
      %p103 = scmp.ne.s32.totalorder %s94, %s95
      %p104 = scmp.eq.s32.totalorder %s37, 0
      %p105 = por %p103, %p104
      %p106 = scmp.ne.s32.totalorder %s94, %s95
      %p107 = scmp.eq.s32.totalorder %s38, 1
      %p108 = por %p106, %p107
      %p110 = scmp.ne.s32.totalorder %s95, %s109
      %p111 = scmp.eq.s32.totalorder %s38, 0
      %p112 = por %p110, %p111
      %s114 = sadd.s32 %s113, 1
      %p117 = scmp.eq.s32.totalorder %s32, 1
      %p118 = scmp.ne.s32.totalorder %s113, %s115
      %p119 = scmp.eq.s32.totalorder %s32, 0
      %p120 = por %p118, %p119
      %p121 = scmp.ne.s32.totalorder %s113, %s115
      %p122 = scmp.eq.s32.totalorder %s37, 1
      %p123 = por %p121, %p122
      %p124 = scmp.ne.s32.totalorder %s115, %s116
      %p125 = scmp.eq.s32.totalorder %s37, 0
      %p126 = por %p124, %p125
      %p127 = scmp.ne.s32.totalorder %s115, %s116
      %p128 = scmp.eq.s32.totalorder %s38, 1
      %p129 = por %p127, %p128
      %p131 = scmp.ne.s32.totalorder %s116, %s130
      %p132 = scmp.eq.s32.totalorder %s38, 0
      %p133 = por %p131, %p132
      %s135 = sadd.s32 %s134, 1
      %p138 = scmp.eq.s32.totalorder %s32, 1
      %p139 = scmp.ne.s32.totalorder %s134, %s136
      %p140 = scmp.eq.s32.totalorder %s32, 0
      %p141 = por %p139, %p140
      %p142 = scmp.ne.s32.totalorder %s134, %s136
      %p143 = scmp.eq.s32.totalorder %s37, 1
      %p144 = por %p142, %p143
      %p145 = scmp.ne.s32.totalorder %s136, %s137
      %p146 = scmp.eq.s32.totalorder %s37, 0
      %p147 = por %p145, %p146
      %p148 = scmp.ne.s32.totalorder %s136, %s137
      %p149 = scmp.eq.s32.totalorder %s38, 1
      %p150 = por %p148, %p149
      %p152 = scmp.ne.s32.totalorder %s137, %s151
      %p153 = scmp.eq.s32.totalorder %s38, 0
      %p154 = por %p152, %p153
      %s156 = sadd.s32 %s155, 1
      %p159 = scmp.eq.s32.totalorder %s32, 1
      %p160 = scmp.ne.s32.totalorder %s155, %s157
      %p161 = scmp.eq.s32.totalorder %s32, 0
      %p162 = por %p160, %p161
      %p163 = scmp.ne.s32.totalorder %s155, %s157
      %p164 = scmp.eq.s32.totalorder %s37, 1
      %p165 = por %p163, %p164
      %p166 = scmp.ne.s32.totalorder %s157, %s158
      %p167 = scmp.eq.s32.totalorder %s37, 0
      %p168 = por %p166, %p167
      %p169 = scmp.ne.s32.totalorder %s157, %s158
      %p170 = scmp.eq.s32.totalorder %s38, 1
      %p171 = por %p169, %p170
      %p173 = scmp.ne.s32.totalorder %s158, %s172
      %p174 = scmp.eq.s32.totalorder %s38, 0
      %p175 = por %p173, %p174
      %s177 = sadd.s32 %s176, 1
      %p180 = scmp.eq.s32.totalorder %s32, 1
      %p181 = scmp.ne.s32.totalorder %s176, %s178
      %p182 = scmp.eq.s32.totalorder %s32, 0
      %p183 = por %p181, %p182
      %p184 = scmp.ne.s32.totalorder %s176, %s178
      %p185 = scmp.eq.s32.totalorder %s37, 1
      %p186 = por %p184, %p185
      %p187 = scmp.ne.s32.totalorder %s178, %s179
      %p188 = scmp.eq.s32.totalorder %s37, 0
      %p189 = por %p187, %p188
      %p190 = scmp.ne.s32.totalorder %s178, %s179
      %p191 = scmp.eq.s32.totalorder %s38, 1
      %p192 = por %p190, %p191
      %p194 = scmp.ne.s32.totalorder %s179, %s193
      %p195 = scmp.eq.s32.totalorder %s38, 0
      %p196 = por %p194, %p195
      %s198 = sadd.s32 %s197, 1
      %p201 = scmp.eq.s32.totalorder %s32, 1
      %p202 = scmp.ne.s32.totalorder %s197, %s199
      %p203 = scmp.eq.s32.totalorder %s32, 0
      %p204 = por %p202, %p203
      %p205 = scmp.ne.s32.totalorder %s197, %s199
      %p206 = scmp.eq.s32.totalorder %s37, 1
      %p207 = por %p205, %p206
      %p208 = scmp.ne.s32.totalorder %s199, %s200
      %p209 = scmp.eq.s32.totalorder %s37, 0
      %p210 = por %p208, %p209
      %p211 = scmp.ne.s32.totalorder %s199, %s200
      %p212 = scmp.eq.s32.totalorder %s38, 1
      %p213 = por %p211, %p212
      %p215 = scmp.ne.s32.totalorder %s200, %s214
      %p216 = scmp.eq.s32.totalorder %s38, 0
      %p217 = por %p215, %p216
      %s219 = sadd.s32 %s218, 1
      %p222 = scmp.eq.s32.totalorder %s32, 1
      %p223 = scmp.ne.s32.totalorder %s218, %s220
      %p224 = scmp.eq.s32.totalorder %s32, 0
      %p225 = por %p223, %p224
      %p226 = scmp.ne.s32.totalorder %s218, %s220
      %p227 = scmp.eq.s32.totalorder %s37, 1
      %p228 = por %p226, %p227
      %p229 = scmp.ne.s32.totalorder %s220, %s221
      %p230 = scmp.eq.s32.totalorder %s37, 0
      %p231 = por %p229, %p230
      %p232 = scmp.ne.s32.totalorder %s220, %s221
      %p233 = scmp.eq.s32.totalorder %s38, 1
      %p234 = por %p232, %p233
      %p236 = scmp.ne.s32.totalorder %s221, %s235
      %p237 = scmp.eq.s32.totalorder %s38, 0
      %p238 = por %p236, %p237
      %s240 = sadd.s32 %s239, 1
      %p243 = scmp.eq.s32.totalorder %s32, 1
      %p244 = scmp.ne.s32.totalorder %s239, %s241
      %p245 = scmp.eq.s32.totalorder %s32, 0
      %p246 = por %p244, %p245
      %p247 = scmp.ne.s32.totalorder %s239, %s241
      %p248 = scmp.eq.s32.totalorder %s37, 1
      %p249 = por %p247, %p248
      %p250 = scmp.ne.s32.totalorder %s241, %s242
      %p251 = scmp.eq.s32.totalorder %s37, 0
      %p252 = por %p250, %p251
      %p253 = scmp.ne.s32.totalorder %s241, %s242
      %p254 = scmp.eq.s32.totalorder %s38, 1
      %p255 = por %p253, %p254
      %p257 = scmp.ne.s32.totalorder %s242, %s256
      %p258 = scmp.eq.s32.totalorder %s38, 0
      %p259 = por %p257, %p258
      %s261 = sadd.s32 %s260, 1
      %p264 = scmp.eq.s32.totalorder %s32, 1
      %p265 = scmp.ne.s32.totalorder %s260, %s262
      %p266 = scmp.eq.s32.totalorder %s32, 0
      %p267 = por %p265, %p266
      %p268 = scmp.ne.s32.totalorder %s260, %s262
      %p269 = scmp.eq.s32.totalorder %s37, 1
      %p270 = por %p268, %p269
      %p271 = scmp.ne.s32.totalorder %s262, %s263
      %p272 = scmp.eq.s32.totalorder %s37, 0
      %p273 = por %p271, %p272
      %p274 = scmp.ne.s32.totalorder %s262, %s263
      %p275 = scmp.eq.s32.totalorder %s38, 1
      %p276 = por %p274, %p275
      %p278 = scmp.ne.s32.totalorder %s263, %s277
      %p279 = scmp.eq.s32.totalorder %s38, 0
      %p280 = por %p278, %p279
      %s282 = sadd.s32 %s281, 1
      %p285 = scmp.eq.s32.totalorder %s32, 1
      %p286 = scmp.ne.s32.totalorder %s281, %s283
      %p287 = scmp.eq.s32.totalorder %s32, 0
      %p288 = por %p286, %p287
      %p289 = scmp.ne.s32.totalorder %s281, %s283
      %p290 = scmp.eq.s32.totalorder %s37, 1
      %p291 = por %p289, %p290
      %p292 = scmp.ne.s32.totalorder %s283, %s284
      %p293 = scmp.eq.s32.totalorder %s37, 0
      %p294 = por %p292, %p293
      %p295 = scmp.ne.s32.totalorder %s283, %s284
      %p296 = scmp.eq.s32.totalorder %s38, 1
      %p297 = por %p295, %p296
      %p299 = scmp.ne.s32.totalorder %s284, %s298
      %p300 = scmp.eq.s32.totalorder %s38, 0
      %p301 = por %p299, %p300
      %s303 = sadd.s32 %s302, 1
      %p306 = scmp.eq.s32.totalorder %s32, 1
      %p307 = scmp.ne.s32.totalorder %s302, %s304
      %p308 = scmp.eq.s32.totalorder %s32, 0
      %p309 = por %p307, %p308
      %p310 = scmp.ne.s32.totalorder %s302, %s304
      %p311 = scmp.eq.s32.totalorder %s37, 1
      %p312 = por %p310, %p311
      %p313 = scmp.ne.s32.totalorder %s304, %s305
      %p314 = scmp.eq.s32.totalorder %s37, 0
      %p315 = por %p313, %p314
      %p316 = scmp.ne.s32.totalorder %s304, %s305
      %p317 = scmp.eq.s32.totalorder %s38, 1
      %p318 = por %p316, %p317
      %p320 = scmp.ne.s32.totalorder %s305, %s319
      %p321 = scmp.eq.s32.totalorder %s38, 0
      %p322 = por %p320, %p321
      %s324 = sadd.s32 %s323, 1
      %p327 = scmp.eq.s32.totalorder %s32, 1
      %p328 = scmp.ne.s32.totalorder %s323, %s325
      %p329 = scmp.eq.s32.totalorder %s32, 0
      %p330 = por %p328, %p329
      %p331 = scmp.ne.s32.totalorder %s323, %s325
      %p332 = scmp.eq.s32.totalorder %s37, 1
      %p333 = por %p331, %p332
      %p334 = scmp.ne.s32.totalorder %s325, %s326
      %p335 = scmp.eq.s32.totalorder %s37, 0
      %p336 = por %p334, %p335
      %p337 = scmp.ne.s32.totalorder %s325, %s326
      %p338 = scmp.eq.s32.totalorder %s38, 1
      %p339 = por %p337, %p338
      %p341 = scmp.ne.s32.totalorder %s326, %s340
      %p342 = scmp.eq.s32.totalorder %s38, 0
      %p343 = por %p341, %p342
      %s344 = ssub.s32 %s32, %s39
      %p345 = scmp.eq.s32.totalorder %s344, 0
      %s347 = sadd.s32 %s346, 1
      %s348 = scalar_select %p345, %s346, %s347
      %p351 = pneg %p345
      %p352 = scmp.eq.s32.totalorder %s32, 1
      %p353 = por %p351, %p352
      %p354 = scmp.ne.s32.totalorder %s346, %s349
      %p355 = scmp.eq.s32.totalorder %s32, 0
      %p356 = por %p354, %p355
      %p357 = scmp.ne.s32.totalorder %s346, %s349
      %p358 = scmp.eq.s32.totalorder %s37, 1
      %p359 = por %p357, %p358
      %p360 = scmp.ne.s32.totalorder %s349, %s350
      %p361 = scmp.eq.s32.totalorder %s37, 0
      %p362 = por %p360, %p361
      %p363 = scmp.ne.s32.totalorder %s349, %s350
      %p364 = scmp.eq.s32.totalorder %s38, 1
      %p365 = por %p363, %p364
      %p367 = scmp.ne.s32.totalorder %s350, %s366
      %p368 = scmp.eq.s32.totalorder %s38, 0
      %p369 = por %p367, %p368
      %s370 = ssub.s32 %s32, %s39
      %p371 = scmp.eq.s32.totalorder %s370, 0
      %s373 = sadd.s32 %s372, 1
      %s374 = scalar_select %p371, %s372, %s373
      %p377 = pneg %p371
      %p378 = scmp.eq.s32.totalorder %s32, 1
      %p379 = por %p377, %p378
      %p380 = scmp.ne.s32.totalorder %s372, %s375
      %p381 = scmp.eq.s32.totalorder %s32, 0
      %p382 = por %p380, %p381
      %p383 = scmp.ne.s32.totalorder %s372, %s375
      %p384 = scmp.eq.s32.totalorder %s37, 1
      %p385 = por %p383, %p384
      %p386 = scmp.ne.s32.totalorder %s375, %s376
      %p387 = scmp.eq.s32.totalorder %s37, 0
      %p388 = por %p386, %p387
      %p389 = scmp.ne.s32.totalorder %s375, %s376
      %p390 = scmp.eq.s32.totalorder %s38, 1
      %p391 = por %p389, %p390
      %p393 = scmp.ne.s32.totalorder %s376, %s392
      %p394 = scmp.eq.s32.totalorder %s38, 0
      %p395 = por %p393, %p394
      %p396 = scmp.le.s32.totalorder 1, %s32
      %p397 = scmp.lt.s32.totalorder %s32, 3
      %p398 = pnand %p396, %p397
      %p399 = pneg %p398
      // Predicated region
      $region9: #{tpu_custom_call.1} parent=5 // pred_check
        _
      $region10: #{tpu_custom_call.1} parent=5 // pred_check_branch
        %401 = sbr.rel (%p398) target = $region12
      $region11: #{tpu_custom_call.1} parent=5 // pred_region
        %s402 = ssub.s32 %s32, 1
        // Predicated region
        $region13: #{tpu_custom_call.1} parent=11 // pred_check
          %p403 = pneg %p105
        $region14: #{tpu_custom_call.1} parent=11 // pred_check_branch
          %405 = sbr.rel (%p403) target = $region16
        $region15: #{tpu_custom_call.1} parent=11 // pred_region
          _
        $region16: #{tpu_custom_call.1} parent=11 // pred_fallthru
          _
        // Predicated region
        $region17: #{tpu_custom_call.1} parent=11 // pred_check
          %p406 = pneg %p126
        $region18: #{tpu_custom_call.1} parent=11 // pred_check_branch
          %408 = sbr.rel (%p406) target = $region20
        $region19: #{tpu_custom_call.1} parent=11 // pred_region
          %410 = vsyncadd [#allocation3], 0
          %s412 = sshll.u32 %s3, 4
          %s413 = int_to_ptr.hbm [resolvable:$true] %s412
          %s414 = sshll.u32 [#allocation2], 4
          %s415 = int_to_ptr.vmem [resolvable:$true] %s414
          %417 = dma.hbm_to_vmem [thread:$0]  %s413, 16, %s415, [#allocation3]
        $region20: #{tpu_custom_call.1} parent=11 // pred_fallthru
          _
        // Predicated region
        $region21: #{tpu_custom_call.1} parent=11 // pred_check
          %p418 = pneg %p147
        $region22: #{tpu_custom_call.1} parent=11 // pred_check_branch
          %420 = sbr.rel (%p418) target = $region24
        $region23: #{tpu_custom_call.1} parent=11 // pred_region
          %422 = vsyncadd [#allocation6], 0
          %s423 = sshll.u32 %s4, 4
          %s424 = int_to_ptr.hbm [resolvable:$true] %s423
          %s425 = sshll.u32 [#allocation5], 4
          %s426 = int_to_ptr.vmem [resolvable:$true] %s425
          %431 = dma.hbm_to_vmem [thread:$0]  %s424, 2048, %s426, [#allocation6], 128, 128, 8
        $region24: #{tpu_custom_call.1} parent=11 // pred_fallthru
          _
        // Predicated region
        $region25: #{tpu_custom_call.1} parent=11 // pred_check
          %p432 = pneg %p168
        $region26: #{tpu_custom_call.1} parent=11 // pred_check_branch
          %434 = sbr.rel (%p432) target = $region28
        $region27: #{tpu_custom_call.1} parent=11 // pred_region
          _
        $region28: #{tpu_custom_call.1} parent=11 // pred_fallthru
          _
        // Predicated region
        $region29: #{tpu_custom_call.1} parent=11 // pred_check
          %p435 = pneg %p189
        $region30: #{tpu_custom_call.1} parent=11 // pred_check_branch
          %437 = sbr.rel (%p435) target = $region32
        $region31: #{tpu_custom_call.1} parent=11 // pred_region
          %439 = vsyncadd [#allocation6], 0
          %s440 = sshll.u32 %s6, 4
          %s441 = int_to_ptr.hbm [resolvable:$true] %s440
          %s442 = sshll.u32 [#allocation7], 4
          %s443 = int_to_ptr.vmem [resolvable:$true] %s442
          %448 = dma.hbm_to_vmem [thread:$0]  %s441, 2048, %s443, [#allocation6], 128, 128, 8
        $region32: #{tpu_custom_call.1} parent=11 // pred_fallthru
          _
        // Predicated region
        $region33: #{tpu_custom_call.1} parent=11 // pred_check
          %p449 = pneg %p210
        $region34: #{tpu_custom_call.1} parent=11 // pred_check_branch
          %451 = sbr.rel (%p449) target = $region36
        $region35: #{tpu_custom_call.1} parent=11 // pred_region
          _
        $region36: #{tpu_custom_call.1} parent=11 // pred_fallthru
          _
        // Predicated region
        $region37: #{tpu_custom_call.1} parent=11 // pred_check
          %p452 = pneg %p231
        $region38: #{tpu_custom_call.1} parent=11 // pred_check_branch
          %454 = sbr.rel (%p452) target = $region40
        $region39: #{tpu_custom_call.1} parent=11 // pred_region
          %456 = vsyncadd [#allocation9], 0
          %s457 = sshll.u32 %s8, 4
          %s458 = int_to_ptr.hbm [resolvable:$true] %s457
          %s459 = sshll.u32 [#allocation8], 4
          %s460 = int_to_ptr.vmem [resolvable:$true] %s459
          %465 = dma.hbm_to_vmem [thread:$0]  %s458, 1024, %s460, [#allocation9], 128, 128, 8
        $region40: #{tpu_custom_call.1} parent=11 // pred_fallthru
          _
        // Predicated region
        $region41: #{tpu_custom_call.1} parent=11 // pred_check
          %p466 = pneg %p252
        $region42: #{tpu_custom_call.1} parent=11 // pred_check_branch
          %468 = sbr.rel (%p466) target = $region44
        $region43: #{tpu_custom_call.1} parent=11 // pred_region
          _
        $region44: #{tpu_custom_call.1} parent=11 // pred_fallthru
          _
        // Predicated region
        $region45: #{tpu_custom_call.1} parent=11 // pred_check
          %p469 = pneg %p273
        $region46: #{tpu_custom_call.1} parent=11 // pred_check_branch
          %471 = sbr.rel (%p469) target = $region48
        $region47: #{tpu_custom_call.1} parent=11 // pred_region
          %473 = vsyncadd [#allocation9], 0
          %s474 = sshll.u32 %s10, 4
          %s475 = int_to_ptr.hbm [resolvable:$true] %s474
          %s476 = sshll.u32 [#allocation10], 4
          %s477 = int_to_ptr.vmem [resolvable:$true] %s476
          %482 = dma.hbm_to_vmem [thread:$0]  %s475, 2048, %s477, [#allocation9], 128, 128, 8
        $region48: #{tpu_custom_call.1} parent=11 // pred_fallthru
          _
        // Predicated region
        $region49: #{tpu_custom_call.1} parent=11 // pred_check
          %p483 = pneg %p294
        $region50: #{tpu_custom_call.1} parent=11 // pred_check_branch
          %485 = sbr.rel (%p483) target = $region52
        $region51: #{tpu_custom_call.1} parent=11 // pred_region
          _
        $region52: #{tpu_custom_call.1} parent=11 // pred_fallthru
          _
        // Predicated region
        $region53: #{tpu_custom_call.1} parent=11 // pred_check
          %p486 = pneg %p315
        $region54: #{tpu_custom_call.1} parent=11 // pred_check_branch
          %488 = sbr.rel (%p486) target = $region56
        $region55: #{tpu_custom_call.1} parent=11 // pred_region
          %490 = vsyncadd [#allocation12], 0
          %s491 = sshll.u32 %s12, 4
          %s492 = int_to_ptr.hbm [resolvable:$true] %s491
          %s493 = sshll.u32 [#allocation11], 4
          %s494 = int_to_ptr.vmem [resolvable:$true] %s493
          %499 = dma.hbm_to_vmem [thread:$0]  %s492, 2048, %s494, [#allocation12], 128, 128, 8
        $region56: #{tpu_custom_call.1} parent=11 // pred_fallthru
          _
        // Predicated region
        $region57: #{tpu_custom_call.1} parent=11 // pred_check
          %p500 = pneg %p336
        $region58: #{tpu_custom_call.1} parent=11 // pred_check_branch
          %502 = sbr.rel (%p500) target = $region60
        $region59: #{tpu_custom_call.1} parent=11 // pred_region
          _
        $region60: #{tpu_custom_call.1} parent=11 // pred_fallthru
          _
      $region12: #{tpu_custom_call.1} parent=5 // pred_fallthru
        _
      %p503 = scmp.lt.s32.totalorder %s32, 2
      // Predicated region
      $region61: #{tpu_custom_call.1} parent=5 // pred_check
        %p504 = pneg %p503
      $region62: #{tpu_custom_call.1} parent=5 // pred_check_branch
        %506 = sbr.rel (%p504) target = $region64
      $region63: #{tpu_custom_call.1} parent=5 // pred_region
        // Predicated region
        $region65: #{tpu_custom_call.1} parent=63 // pred_check
          %p507 = pneg %p52
        $region66: #{tpu_custom_call.1} parent=63 // pred_check_branch
          %509 = sbr.rel (%p507) target = $region68
        $region67: #{tpu_custom_call.1} parent=63 // pred_region
          %s510 = smul.u32 16, %s32
          %p511 = scmp.lt.s32.totalorder %s510, 31
          %s512 = scalar_select %p511, %s510, 31
          %s513 = smul.addr %s512, 8
          %s514 = scalar_lea.vmem %s0, %s513
          %s515 = smul.u32 16, %s32
        $region68: #{tpu_custom_call.1} parent=63 // pred_fallthru
          _
        // Predicated region
        $region69: #{tpu_custom_call.1} parent=63 // pred_check
          %p516 = pneg %p78
        $region70: #{tpu_custom_call.1} parent=63 // pred_check_branch
          %518 = sbr.rel (%p516) target = $region72
        $region71: #{tpu_custom_call.1} parent=63 // pred_region
          %s519 = smul.u32 16, %s32
          %p520 = scmp.lt.s32.totalorder %s519, 31
          %s521 = scalar_select %p520, %s519, 31
          %s522 = smul.addr %s521, 8
          %s523 = scalar_lea.vmem %s1, %s522
          %s524 = smul.u32 16, %s32
        $region72: #{tpu_custom_call.1} parent=63 // pred_fallthru
          _
      $region64: #{tpu_custom_call.1} parent=5 // pred_fallthru
        _
      %p525 = scmp.le.s32.totalorder 1, %s32
      %p526 = scmp.lt.s32.totalorder %s32, 3
      %p527 = pnand %p525, %p526
      %p528 = pneg %p527
      // Predicated region
      $region73: #{tpu_custom_call.1} parent=5 // pred_check
        _
      $region74: #{tpu_custom_call.1} parent=5 // pred_check_branch
        %530 = sbr.rel (%p527) target = $region76
      $region75: #{tpu_custom_call.1} parent=5 // pred_region
        %s531 = ssub.s32 %s32, 1
        // Predicated region
        $region77: #{tpu_custom_call.1} parent=75 // pred_check
          %p532 = pneg %p126
        $region78: #{tpu_custom_call.1} parent=75 // pred_check_branch
          %534 = sbr.rel (%p532) target = $region80
        $region79: #{tpu_custom_call.1} parent=75 // pred_region
          %536 = dma.done [#allocation3], 16
        $region80: #{tpu_custom_call.1} parent=75 // pred_fallthru
          _
        // Predicated region
        $region81: #{tpu_custom_call.1} parent=75 // pred_check
          %p537 = pneg %p147
        $region82: #{tpu_custom_call.1} parent=75 // pred_check_branch
          %539 = sbr.rel (%p537) target = $region84
        $region83: #{tpu_custom_call.1} parent=75 // pred_region
          %541 = dma.done [#allocation6], 2048
        $region84: #{tpu_custom_call.1} parent=75 // pred_fallthru
          _
        // Predicated region
        $region85: #{tpu_custom_call.1} parent=75 // pred_check
          %p542 = pneg %p189
        $region86: #{tpu_custom_call.1} parent=75 // pred_check_branch
          %544 = sbr.rel (%p542) target = $region88
        $region87: #{tpu_custom_call.1} parent=75 // pred_region
          %546 = dma.done [#allocation6], 2048
        $region88: #{tpu_custom_call.1} parent=75 // pred_fallthru
          _
        // Predicated region
        $region89: #{tpu_custom_call.1} parent=75 // pred_check
          %p547 = pneg %p231
        $region90: #{tpu_custom_call.1} parent=75 // pred_check_branch
          %549 = sbr.rel (%p547) target = $region92
        $region91: #{tpu_custom_call.1} parent=75 // pred_region
          %551 = dma.done [#allocation9], 1024
        $region92: #{tpu_custom_call.1} parent=75 // pred_fallthru
          _
        // Predicated region
        $region93: #{tpu_custom_call.1} parent=75 // pred_check
          %p552 = pneg %p273
        $region94: #{tpu_custom_call.1} parent=75 // pred_check_branch
          %554 = sbr.rel (%p552) target = $region96
        $region95: #{tpu_custom_call.1} parent=75 // pred_region
          %556 = dma.done [#allocation9], 2048
        $region96: #{tpu_custom_call.1} parent=75 // pred_fallthru
          _
        // Predicated region
        $region97: #{tpu_custom_call.1} parent=75 // pred_check
          %p557 = pneg %p315
        $region98: #{tpu_custom_call.1} parent=75 // pred_check_branch
          %559 = sbr.rel (%p557) target = $region100
        $region99: #{tpu_custom_call.1} parent=75 // pred_region
          %561 = dma.done [#allocation12], 2048
        $region100: #{tpu_custom_call.1} parent=75 // pred_fallthru
          _
        %s562 = smul.u32 16, %s37
        %p563 = scmp.lt.s32.totalorder %s562, 31
        %s564 = scalar_select %p563, %s562, 31
        %s565 = smul.addr %s564, 8
        %s566 = scalar_lea.vmem %s0, %s565
        %p567 = pneg %p58
        %p568 = pneg %p55
        %s569 = smul.u32 16, %s37
        %p570 = scmp.lt.s32.totalorder %s569, 31
        %s571 = scalar_select %p570, %s569, 31
        %s572 = smul.addr %s571, 8
        %s573 = scalar_lea.vmem %s1, %s572
        %p574 = pneg %p84
        %p575 = pneg %p81
        %p576 = pneg %p105
        %p577 = pneg %p102
        %p578 = pneg %p126
        %p579 = pneg %p123
        %p580 = pneg %p147
        %p581 = pneg %p144
        %p582 = pneg %p168
        %p583 = pneg %p165
        %p584 = pneg %p189
        %p585 = pneg %p186
        %p586 = pneg %p210
        %p587 = pneg %p207
        %p588 = pneg %p231
        %p589 = pneg %p228
        %p590 = pneg %p252
        %p591 = pneg %p249
        %p592 = pneg %p273
        %p593 = pneg %p270
        %p594 = pneg %p294
        %p595 = pneg %p291
        %p596 = pneg %p315
        %p597 = pneg %p312
        %p598 = pneg %p336
        %p599 = pneg %p333
        %p600 = pneg %p362
        %p601 = pneg %p359
        %s602 = sand.u32 %s349, 1
        %s603 = scalar_lea.sflag [#allocation4], %s602
        %s604 = sand.u32 %s349, 1
        %s605 = smul.addr %s604, 128
        %s606 = scalar_lea.vmem [#allocation13], %s605
        %p607 = pneg %p388
        %p608 = pneg %p385
        %s609 = sand.u32 %s375, 1
        %s610 = scalar_lea.sflag [#allocation15], %s609
        %s611 = sand.u32 %s375, 1
        %s612 = smul.addr %s611, 128
        %s613 = scalar_lea.vmem [#allocation14], %s612
        %s614 = smul.u32 16, %s37
        %p615 = scmp.lt.s32.totalorder %s614, 31
        %s616 = scalar_select %p615, %s614, 31
        %s617 = smul.addr %s616, 8
        %s618 = scalar_lea.vmem %s0, %s617
        %s619 = smul.u32 16, %s37
        %s620 = smul.u32 16, %s37
        %p621 = scmp.lt.s32.totalorder %s620, 31
        %s622 = scalar_select %p621, %s620, 31
        %s623 = smul.addr %s622, 8
        %s624 = scalar_lea.vmem %s1, %s623
        %s625 = smul.u32 16, %s37
        %s626 = smul.u32 16, %s37
        %s627 = smul.u32 16, %s37
        %v628 = vld [vmem:[%s618] sm:$0xff]
        %v629 = vld [vmem:[%s618 + $0x8] sm:$0xff]
        %v630 = vld [vmem:[%s618 + $0x10] sm:$0xff]
        %v631 = vld [vmem:[%s618 + $0x18] sm:$0xff]
        %v632 = vld [vmem:[%s618 + $0x20] sm:$0xff]
        %v633 = vld [vmem:[%s618 + $0x28] sm:$0xff]
        %v634 = vld [vmem:[%s618 + $0x30] sm:$0xff]
        %v635 = vld [vmem:[%s618 + $0x38] sm:$0xff]
        %v636 = vld [vmem:[%s618 + $0x40] sm:$0xff]
        %v637 = vld [vmem:[%s618 + $0x48] sm:$0xff]
        %v638 = vld [vmem:[%s618 + $0x50] sm:$0xff]
        %v639 = vld [vmem:[%s618 + $0x58] sm:$0xff]
        %v640 = vld [vmem:[%s618 + $0x60] sm:$0xff]
        %v641 = vld [vmem:[%s618 + $0x68] sm:$0xff]
        %v642 = vld [vmem:[%s618 + $0x70] sm:$0xff]
        %v643 = vld [vmem:[%s618 + $0x78] sm:$0xff]
        %v644 = vld [vmem:[%s2] sm:$0xff]
        %v645 = vld [vmem:[%s2 + $0x8] sm:$0xff]
        %v646 = vld [vmem:[%s2 + $0x10] sm:$0xff]
        %v647 = vld [vmem:[%s2 + $0x18] sm:$0xff]
        %v648 = vld [vmem:[%s2 + $0x20] sm:$0xff]
        %v649 = vld [vmem:[%s2 + $0x28] sm:$0xff]
        %v650 = vld [vmem:[%s2 + $0x30] sm:$0xff]
        %v651 = vld [vmem:[%s2 + $0x38] sm:$0xff]
        %v652 = vld [vmem:[%s2 + $0x40] sm:$0xff]
        %v653 = vld [vmem:[%s2 + $0x48] sm:$0xff]
        %v654 = vld [vmem:[%s2 + $0x50] sm:$0xff]
        %v655 = vld [vmem:[%s2 + $0x58] sm:$0xff]
        %v656 = vld [vmem:[%s2 + $0x60] sm:$0xff]
        %v657 = vld [vmem:[%s2 + $0x68] sm:$0xff]
        %v658 = vld [vmem:[%s2 + $0x70] sm:$0xff]
        %v659 = vld [vmem:[%s2 + $0x78] sm:$0xff]
        %v660 = vld [vmem:[#allocation2] sm:$0x1]
        %v662 = vperm.slane %v660, 0
        %664 = vmatpush.msra.mxu0 %v659
        %665 = vmatpush.msra.mxu0 %v658
        %666 = vmatpush.msra.mxu0 %v657
        %667 = vmatpush.msra.mxu0 %v656
        %668 = vmatpush.msra.mxu0 %v655
        %669 = vmatpush.msra.mxu0 %v654
        %670 = vmatpush.msra.mxu0 %v653
        %671 = vmatpush.msra.mxu0 %v652
        %672 = vmatpush.msra.mxu0 %v651
        %673 = vmatpush.msra.mxu0 %v650
        %674 = vmatpush.msra.mxu0 %v649
        %675 = vmatpush.msra.mxu0 %v648
        %676 = vmatpush.msra.mxu0 %v647
        %677 = vmatpush.msra.mxu0 %v646
        %678 = vmatpush.msra.mxu0 %v645
        %679 = vmatpush.msra.mxu0 %v644
        %680 = vmatmul.f32.gmra.mxu0 %v628
        %v681 = vpop.f32.mrf.mxu0
        %v682 = vadd.f32 %v662, %v681
        %683 = vmatmul.f32.gmra.mxu0 %v629
        %v684 = vpop.f32.mrf.mxu0
        %v685 = vadd.f32 %v662, %v684
        %686 = vmatmul.f32.gmra.mxu0 %v630
        %v687 = vpop.f32.mrf.mxu0
        %v688 = vadd.f32 %v662, %v687
        %689 = vmatmul.f32.gmra.mxu0 %v631
        %v690 = vpop.f32.mrf.mxu0
        %v691 = vadd.f32 %v662, %v690
        %692 = vmatmul.f32.gmra.mxu0 %v632
        %v693 = vpop.f32.mrf.mxu0
        %v694 = vadd.f32 %v662, %v693
        %695 = vmatmul.f32.gmra.mxu0 %v633
        %v696 = vpop.f32.mrf.mxu0
        %v697 = vadd.f32 %v662, %v696
        %698 = vmatmul.f32.gmra.mxu0 %v634
        %v699 = vpop.f32.mrf.mxu0
        %v700 = vadd.f32 %v662, %v699
        %701 = vmatmul.f32.gmra.mxu0 %v635
        %v702 = vpop.f32.mrf.mxu0
        %v703 = vadd.f32 %v662, %v702
        %704 = vmatmul.f32.gmra.mxu0 %v636
        %v705 = vpop.f32.mrf.mxu0
        %v706 = vadd.f32 %v662, %v705
        %707 = vmatmul.f32.gmra.mxu0 %v637
        %v708 = vpop.f32.mrf.mxu0
        %v709 = vadd.f32 %v662, %v708
        %710 = vmatmul.f32.gmra.mxu0 %v638
        %v711 = vpop.f32.mrf.mxu0
        %v712 = vadd.f32 %v662, %v711
        %713 = vmatmul.f32.gmra.mxu0 %v639
        %v714 = vpop.f32.mrf.mxu0
        %v715 = vadd.f32 %v662, %v714
        %716 = vmatmul.f32.gmra.mxu0 %v640
        %v717 = vpop.f32.mrf.mxu0
        %v718 = vadd.f32 %v662, %v717
        %719 = vmatmul.f32.gmra.mxu0 %v641
        %v720 = vpop.f32.mrf.mxu0
        %v721 = vadd.f32 %v662, %v720
        %722 = vmatmul.f32.gmra.mxu0 %v642
        %v723 = vpop.f32.mrf.mxu0
        %v724 = vadd.f32 %v662, %v723
        %725 = vmatmul.f32.gmra.mxu0 %v643
        %v726 = vpop.f32.mrf.mxu0
        %v727 = vadd.f32 %v662, %v726
        %728 = vdwg.mxu0
        %v729 = vmax.f32 %v682, 0.0
        %v730 = vmax.f32 %v685, 0.0
        %v731 = vmax.f32 %v688, 0.0
        %v732 = vmax.f32 %v691, 0.0
        %v733 = vmax.f32 %v694, 0.0
        %v734 = vmax.f32 %v697, 0.0
        %v735 = vmax.f32 %v700, 0.0
        %v736 = vmax.f32 %v703, 0.0
        %v737 = vmax.f32 %v706, 0.0
        %v738 = vmax.f32 %v709, 0.0
        %v739 = vmax.f32 %v712, 0.0
        %v740 = vmax.f32 %v715, 0.0
        %v741 = vmax.f32 %v718, 0.0
        %v742 = vmax.f32 %v721, 0.0
        %v743 = vmax.f32 %v724, 0.0
        %v744 = vmax.f32 %v727, 0.0
        %v745 = vld [vmem:[#allocation5] sm:$0xff]
        %v746 = vld [vmem:[#allocation5 + $0x8] sm:$0xff]
        %v747 = vld [vmem:[#allocation5 + $0x10] sm:$0xff]
        %v748 = vld [vmem:[#allocation5 + $0x18] sm:$0xff]
        %v749 = vld [vmem:[#allocation5 + $0x20] sm:$0xff]
        %v750 = vld [vmem:[#allocation5 + $0x28] sm:$0xff]
        %v751 = vld [vmem:[#allocation5 + $0x30] sm:$0xff]
        %v752 = vld [vmem:[#allocation5 + $0x38] sm:$0xff]
        %v753 = vld [vmem:[#allocation5 + $0x40] sm:$0xff]
        %v754 = vld [vmem:[#allocation5 + $0x48] sm:$0xff]
        %v755 = vld [vmem:[#allocation5 + $0x50] sm:$0xff]
        %v756 = vld [vmem:[#allocation5 + $0x58] sm:$0xff]
        %v757 = vld [vmem:[#allocation5 + $0x60] sm:$0xff]
        %v758 = vld [vmem:[#allocation5 + $0x68] sm:$0xff]
        %v759 = vld [vmem:[#allocation5 + $0x70] sm:$0xff]
        %v760 = vld [vmem:[#allocation5 + $0x78] sm:$0xff]
        %v761 = vld [vmem:[%s5] sm:$0x1]
        %v763 = vperm.slane %v761, 0
        %765 = vmatpush.msra.mxu0 %v760
        %766 = vmatpush.msra.mxu0 %v759
        %767 = vmatpush.msra.mxu0 %v758
        %768 = vmatpush.msra.mxu0 %v757
        %769 = vmatpush.msra.mxu0 %v756
        %770 = vmatpush.msra.mxu0 %v755
        %771 = vmatpush.msra.mxu0 %v754
        %772 = vmatpush.msra.mxu0 %v753
        %773 = vmatpush.msra.mxu0 %v752
        %774 = vmatpush.msra.mxu0 %v751
        %775 = vmatpush.msra.mxu0 %v750
        %776 = vmatpush.msra.mxu0 %v749
        %777 = vmatpush.msra.mxu0 %v748
        %778 = vmatpush.msra.mxu0 %v747
        %779 = vmatpush.msra.mxu0 %v746
        %780 = vmatpush.msra.mxu0 %v745
        %781 = vmatmul.f32.gmra.mxu0 %v729
        %v782 = vpop.f32.mrf.mxu0
        %v783 = vadd.f32 %v763, %v782
        %784 = vmatmul.f32.gmra.mxu0 %v730
        %v785 = vpop.f32.mrf.mxu0
        %v786 = vadd.f32 %v763, %v785
        %787 = vmatmul.f32.gmra.mxu0 %v731
        %v788 = vpop.f32.mrf.mxu0
        %v789 = vadd.f32 %v763, %v788
        %790 = vmatmul.f32.gmra.mxu0 %v732
        %v791 = vpop.f32.mrf.mxu0
        %v792 = vadd.f32 %v763, %v791
        %793 = vmatmul.f32.gmra.mxu0 %v733
        %v794 = vpop.f32.mrf.mxu0
        %v795 = vadd.f32 %v763, %v794
        %796 = vmatmul.f32.gmra.mxu0 %v734
        %v797 = vpop.f32.mrf.mxu0
        %v798 = vadd.f32 %v763, %v797
        %799 = vmatmul.f32.gmra.mxu0 %v735
        %v800 = vpop.f32.mrf.mxu0
        %v801 = vadd.f32 %v763, %v800
        %802 = vmatmul.f32.gmra.mxu0 %v736
        %v803 = vpop.f32.mrf.mxu0
        %v804 = vadd.f32 %v763, %v803
        %805 = vmatmul.f32.gmra.mxu0 %v737
        %v806 = vpop.f32.mrf.mxu0
        %v807 = vadd.f32 %v763, %v806
        %808 = vmatmul.f32.gmra.mxu0 %v738
        %v809 = vpop.f32.mrf.mxu0
        %v810 = vadd.f32 %v763, %v809
        %811 = vmatmul.f32.gmra.mxu0 %v739
        %v812 = vpop.f32.mrf.mxu0
        %v813 = vadd.f32 %v763, %v812
        %814 = vmatmul.f32.gmra.mxu0 %v740
        %v815 = vpop.f32.mrf.mxu0
        %v816 = vadd.f32 %v763, %v815
        %817 = vmatmul.f32.gmra.mxu0 %v741
        %v818 = vpop.f32.mrf.mxu0
        %v819 = vadd.f32 %v763, %v818
        %820 = vmatmul.f32.gmra.mxu0 %v742
        %v821 = vpop.f32.mrf.mxu0
        %v822 = vadd.f32 %v763, %v821
        %823 = vmatmul.f32.gmra.mxu0 %v743
        %v824 = vpop.f32.mrf.mxu0
        %v825 = vadd.f32 %v763, %v824
        %826 = vmatmul.f32.gmra.mxu0 %v744
        %v827 = vpop.f32.mrf.mxu0
        %v828 = vadd.f32 %v763, %v827
        %829 = vdwg.mxu0
        %v830 = vmax.f32 %v783, 0.0
        %v831 = vmax.f32 %v786, 0.0
        %v832 = vmax.f32 %v789, 0.0
        %v833 = vmax.f32 %v792, 0.0
        %v834 = vmax.f32 %v795, 0.0
        %v835 = vmax.f32 %v798, 0.0
        %v836 = vmax.f32 %v801, 0.0
        %v837 = vmax.f32 %v804, 0.0
        %v838 = vmax.f32 %v807, 0.0
        %v839 = vmax.f32 %v810, 0.0
        %v840 = vmax.f32 %v813, 0.0
        %v841 = vmax.f32 %v816, 0.0
        %v842 = vmax.f32 %v819, 0.0
        %v843 = vmax.f32 %v822, 0.0
        %v844 = vmax.f32 %v825, 0.0
        %v845 = vmax.f32 %v828, 0.0
        %v846 = vld [vmem:[#allocation7] sm:$0xff]
        %v847 = vld [vmem:[#allocation7 + $0x8] sm:$0xff]
        %v848 = vld [vmem:[#allocation7 + $0x10] sm:$0xff]
        %v849 = vld [vmem:[#allocation7 + $0x18] sm:$0xff]
        %v850 = vld [vmem:[#allocation7 + $0x20] sm:$0xff]
        %v851 = vld [vmem:[#allocation7 + $0x28] sm:$0xff]
        %v852 = vld [vmem:[#allocation7 + $0x30] sm:$0xff]
        %v853 = vld [vmem:[#allocation7 + $0x38] sm:$0xff]
        %v854 = vld [vmem:[#allocation7 + $0x40] sm:$0xff]
        %v855 = vld [vmem:[#allocation7 + $0x48] sm:$0xff]
        %v856 = vld [vmem:[#allocation7 + $0x50] sm:$0xff]
        %v857 = vld [vmem:[#allocation7 + $0x58] sm:$0xff]
        %v858 = vld [vmem:[#allocation7 + $0x60] sm:$0xff]
        %v859 = vld [vmem:[#allocation7 + $0x68] sm:$0xff]
        %v860 = vld [vmem:[#allocation7 + $0x70] sm:$0xff]
        %v861 = vld [vmem:[#allocation7 + $0x78] sm:$0xff]
        %v862 = vld [vmem:[%s7] sm:$0x1]
        %v864 = vperm.slane %v862, 0
        %866 = vmatpush.msra.mxu0 %v861
        %867 = vmatpush.msra.mxu0 %v860
        %868 = vmatpush.msra.mxu0 %v859
        %869 = vmatpush.msra.mxu0 %v858
        %870 = vmatpush.msra.mxu0 %v857
        %871 = vmatpush.msra.mxu0 %v856
        %872 = vmatpush.msra.mxu0 %v855
        %873 = vmatpush.msra.mxu0 %v854
        %874 = vmatpush.msra.mxu0 %v853
        %875 = vmatpush.msra.mxu0 %v852
        %876 = vmatpush.msra.mxu0 %v851
        %877 = vmatpush.msra.mxu0 %v850
        %878 = vmatpush.msra.mxu0 %v849
        %879 = vmatpush.msra.mxu0 %v848
        %880 = vmatpush.msra.mxu0 %v847
        %881 = vmatpush.msra.mxu0 %v846
        %882 = vmatmul.f32.gmra.mxu0 %v830
        %v883 = vpop.f32.mrf.mxu0
        %v884 = vadd.f32 %v864, %v883
        %885 = vmatmul.f32.gmra.mxu0 %v831
        %v886 = vpop.f32.mrf.mxu0
        %v887 = vadd.f32 %v864, %v886
        %888 = vmatmul.f32.gmra.mxu0 %v832
        %v889 = vpop.f32.mrf.mxu0
        %v890 = vadd.f32 %v864, %v889
        %891 = vmatmul.f32.gmra.mxu0 %v833
        %v892 = vpop.f32.mrf.mxu0
        %v893 = vadd.f32 %v864, %v892
        %894 = vmatmul.f32.gmra.mxu0 %v834
        %v895 = vpop.f32.mrf.mxu0
        %v896 = vadd.f32 %v864, %v895
        %897 = vmatmul.f32.gmra.mxu0 %v835
        %v898 = vpop.f32.mrf.mxu0
        %v899 = vadd.f32 %v864, %v898
        %900 = vmatmul.f32.gmra.mxu0 %v836
        %v901 = vpop.f32.mrf.mxu0
        %v902 = vadd.f32 %v864, %v901
        %903 = vmatmul.f32.gmra.mxu0 %v837
        %v904 = vpop.f32.mrf.mxu0
        %v905 = vadd.f32 %v864, %v904
        %906 = vmatmul.f32.gmra.mxu0 %v838
        %v907 = vpop.f32.mrf.mxu0
        %v908 = vadd.f32 %v864, %v907
        %909 = vmatmul.f32.gmra.mxu0 %v839
        %v910 = vpop.f32.mrf.mxu0
        %v911 = vadd.f32 %v864, %v910
        %912 = vmatmul.f32.gmra.mxu0 %v840
        %v913 = vpop.f32.mrf.mxu0
        %v914 = vadd.f32 %v864, %v913
        %915 = vmatmul.f32.gmra.mxu0 %v841
        %v916 = vpop.f32.mrf.mxu0
        %v917 = vadd.f32 %v864, %v916
        %918 = vmatmul.f32.gmra.mxu0 %v842
        %v919 = vpop.f32.mrf.mxu0
        %v920 = vadd.f32 %v864, %v919
        %921 = vmatmul.f32.gmra.mxu0 %v843
        %v922 = vpop.f32.mrf.mxu0
        %v923 = vadd.f32 %v864, %v922
        %924 = vmatmul.f32.gmra.mxu0 %v844
        %v925 = vpop.f32.mrf.mxu0
        %v926 = vadd.f32 %v864, %v925
        %927 = vmatmul.f32.gmra.mxu0 %v845
        %v928 = vpop.f32.mrf.mxu0
        %v929 = vadd.f32 %v864, %v928
        %930 = vdwg.mxu0
        %v931 = vld [vmem:[%s624] sm:$0xff]
        %v932 = vld [vmem:[%s624 + $0x8] sm:$0xff]
        %v933 = vld [vmem:[%s624 + $0x10] sm:$0xff]
        %v934 = vld [vmem:[%s624 + $0x18] sm:$0xff]
        %v935 = vld [vmem:[%s624 + $0x20] sm:$0xff]
        %v936 = vld [vmem:[%s624 + $0x28] sm:$0xff]
        %v937 = vld [vmem:[%s624 + $0x30] sm:$0xff]
        %v938 = vld [vmem:[%s624 + $0x38] sm:$0xff]
        %v939 = vld [vmem:[%s624 + $0x40] sm:$0xff]
        %v940 = vld [vmem:[%s624 + $0x48] sm:$0xff]
        %v941 = vld [vmem:[%s624 + $0x50] sm:$0xff]
        %v942 = vld [vmem:[%s624 + $0x58] sm:$0xff]
        %v943 = vld [vmem:[%s624 + $0x60] sm:$0xff]
        %v944 = vld [vmem:[%s624 + $0x68] sm:$0xff]
        %v945 = vld [vmem:[%s624 + $0x70] sm:$0xff]
        %v946 = vld [vmem:[%s624 + $0x78] sm:$0xff]
        %v947 = vmul.f32 %v884, 0.5
        %v948 = vmul.f32 %v887, 0.5
        %v949 = vmul.f32 %v890, 0.5
        %v950 = vmul.f32 %v893, 0.5
        %v951 = vmul.f32 %v896, 0.5
        %v952 = vmul.f32 %v899, 0.5
        %v953 = vmul.f32 %v902, 0.5
        %v954 = vmul.f32 %v905, 0.5
        %v955 = vmul.f32 %v908, 0.5
        %v956 = vmul.f32 %v911, 0.5
        %v957 = vmul.f32 %v914, 0.5
        %v958 = vmul.f32 %v917, 0.5
        %v959 = vmul.f32 %v920, 0.5
        %v960 = vmul.f32 %v923, 0.5
        %v961 = vmul.f32 %v926, 0.5
        %v962 = vmul.f32 %v929, 0.5
        %v963 = vmul.f32 %v947, 1.442695
        %v964 = vpow.pop %v963
        %v965 = vmul.f32 %v948, 1.442695
        %v966 = vpow.pop %v965
        %v967 = vmul.f32 %v949, 1.442695
        %v968 = vpow.pop %v967
        %v969 = vmul.f32 %v950, 1.442695
        %v970 = vpow.pop %v969
        %v971 = vmul.f32 %v951, 1.442695
        %v972 = vpow.pop %v971
        %v973 = vmul.f32 %v952, 1.442695
        %v974 = vpow.pop %v973
        %v975 = vmul.f32 %v953, 1.442695
        %v976 = vpow.pop %v975
        %v977 = vmul.f32 %v954, 1.442695
        %v978 = vpow.pop %v977
        %v979 = vmul.f32 %v955, 1.442695
        %v980 = vpow.pop %v979
        %v981 = vmul.f32 %v956, 1.442695
        %v982 = vpow.pop %v981
        %v983 = vmul.f32 %v957, 1.442695
        %v984 = vpow.pop %v983
        %v985 = vmul.f32 %v958, 1.442695
        %v986 = vpow.pop %v985
        %v987 = vmul.f32 %v959, 1.442695
        %v988 = vpow.pop %v987
        %v989 = vmul.f32 %v960, 1.442695
        %v990 = vpow.pop %v989
        %v991 = vmul.f32 %v961, 1.442695
        %v992 = vpow.pop %v991
        %v993 = vmul.f32 %v962, 1.442695
        %v994 = vpow.pop %v993
        %1011 = vrot.lane.b32.xlu0 %v964, 64
        %v1012 = vpop.permute.xlu0 %1011
        %1013 = vrot.lane.b32.xlu0 %v966, 64
        %v1014 = vpop.permute.xlu0 %1013
        %1015 = vrot.lane.b32.xlu0 %v968, 64
        %v1016 = vpop.permute.xlu0 %1015
        %1017 = vrot.lane.b32.xlu0 %v970, 64
        %v1018 = vpop.permute.xlu0 %1017
        %1019 = vrot.lane.b32.xlu0 %v972, 64
        %v1020 = vpop.permute.xlu0 %1019
        %1021 = vrot.lane.b32.xlu0 %v974, 64
        %v1022 = vpop.permute.xlu0 %1021
        %1023 = vrot.lane.b32.xlu0 %v976, 64
        %v1024 = vpop.permute.xlu0 %1023
        %1025 = vrot.lane.b32.xlu0 %v978, 64
        %v1026 = vpop.permute.xlu0 %1025
        %1027 = vrot.lane.b32.xlu0 %v980, 64
        %v1028 = vpop.permute.xlu0 %1027
        %1029 = vrot.lane.b32.xlu0 %v982, 64
        %v1030 = vpop.permute.xlu0 %1029
        %1031 = vrot.lane.b32.xlu0 %v984, 64
        %v1032 = vpop.permute.xlu0 %1031
        %1033 = vrot.lane.b32.xlu0 %v986, 64
        %v1034 = vpop.permute.xlu0 %1033
        %1035 = vrot.lane.b32.xlu0 %v988, 64
        %v1036 = vpop.permute.xlu0 %1035
        %1037 = vrot.lane.b32.xlu0 %v990, 64
        %v1038 = vpop.permute.xlu0 %1037
        %1039 = vrot.lane.b32.xlu0 %v992, 64
        %v1040 = vpop.permute.xlu0 %1039
        %1041 = vrot.lane.b32.xlu0 %v994, 64
        %v1042 = vpop.permute.xlu0 %1041
        %v1059 = vmul.f32 %v931, %v1012
        %v1060 = vmul.f32 %v932, %v1014
        %v1061 = vmul.f32 %v933, %v1016
        %v1062 = vmul.f32 %v934, %v1018
        %v1063 = vmul.f32 %v935, %v1020
        %v1064 = vmul.f32 %v936, %v1022
        %v1065 = vmul.f32 %v937, %v1024
        %v1066 = vmul.f32 %v938, %v1026
        %v1067 = vmul.f32 %v939, %v1028
        %v1068 = vmul.f32 %v940, %v1030
        %v1069 = vmul.f32 %v941, %v1032
        %v1070 = vmul.f32 %v942, %v1034
        %v1071 = vmul.f32 %v943, %v1036
        %v1072 = vmul.f32 %v944, %v1038
        %v1073 = vmul.f32 %v945, %v1040
        %v1074 = vmul.f32 %v946, %v1042
        %v1075 = vadd.f32 %v884, %v1059
        %v1076 = vadd.f32 %v887, %v1060
        %v1077 = vadd.f32 %v890, %v1061
        %v1078 = vadd.f32 %v893, %v1062
        %v1079 = vadd.f32 %v896, %v1063
        %v1080 = vadd.f32 %v899, %v1064
        %v1081 = vadd.f32 %v902, %v1065
        %v1082 = vadd.f32 %v905, %v1066
        %v1083 = vadd.f32 %v908, %v1067
        %v1084 = vadd.f32 %v911, %v1068
        %v1085 = vadd.f32 %v914, %v1069
        %v1086 = vadd.f32 %v917, %v1070
        %v1087 = vadd.f32 %v920, %v1071
        %v1088 = vadd.f32 %v923, %v1072
        %v1089 = vadd.f32 %v926, %v1073
        %v1090 = vadd.f32 %v929, %v1074
        %v1091 = vld [vmem:[#allocation8] sm:$0xff]
        %v1092 = vld [vmem:[#allocation8 + $0x8] sm:$0xff]
        %v1093 = vld [vmem:[#allocation8 + $0x10] sm:$0xff]
        %v1094 = vld [vmem:[#allocation8 + $0x18] sm:$0xff]
        %v1095 = vld [vmem:[#allocation8 + $0x20] sm:$0xff]
        %v1096 = vld [vmem:[#allocation8 + $0x28] sm:$0xff]
        %v1097 = vld [vmem:[#allocation8 + $0x30] sm:$0xff]
        %v1098 = vld [vmem:[#allocation8 + $0x38] sm:$0xff]
        %v1099 = vld [vmem:[%s9] sm:$0x1]
        %v1101 = vperm.slane %v1099, 0
        %vm1103 = vcmask 523264
        %v1105 = vsel %vm1103, %v1075, 0
        %v1108 = vsel %vm1103, %v1076, 0
        %v1111 = vsel %vm1103, %v1077, 0
        %v1114 = vsel %vm1103, %v1078, 0
        %v1117 = vsel %vm1103, %v1079, 0
        %v1120 = vsel %vm1103, %v1080, 0
        %v1123 = vsel %vm1103, %v1081, 0
        %v1126 = vsel %vm1103, %v1082, 0
        %v1129 = vsel %vm1103, %v1083, 0
        %v1132 = vsel %vm1103, %v1084, 0
        %v1135 = vsel %vm1103, %v1085, 0
        %v1138 = vsel %vm1103, %v1086, 0
        %v1141 = vsel %vm1103, %v1087, 0
        %v1144 = vsel %vm1103, %v1088, 0
        %v1147 = vsel %vm1103, %v1089, 0
        %v1150 = vsel %vm1103, %v1090, 0
        %1152 = vmatpush.msra.mxu0 0.0
        %1153 = vmatpush.msra.mxu0 0.0
        %1154 = vmatpush.msra.mxu0 0.0
        %1155 = vmatpush.msra.mxu0 0.0
        %1156 = vmatpush.msra.mxu0 0.0
        %1157 = vmatpush.msra.mxu0 0.0
        %1158 = vmatpush.msra.mxu0 0.0
        %1159 = vmatpush.msra.mxu0 0.0
        %1160 = vmatpush.msra.mxu0 %v1098
        %1161 = vmatpush.msra.mxu0 %v1097
        %1162 = vmatpush.msra.mxu0 %v1096
        %1163 = vmatpush.msra.mxu0 %v1095
        %1164 = vmatpush.msra.mxu0 %v1094
        %1165 = vmatpush.msra.mxu0 %v1093
        %1166 = vmatpush.msra.mxu0 %v1092
        %1167 = vmatpush.msra.mxu0 %v1091
        %1168 = vmatmul.f32.gmra.mxu0 %v1105
        %v1169 = vpop.f32.mrf.mxu0
        %v1170 = vadd.f32 %v1101, %v1169
        %1171 = vmatmul.f32.gmra.mxu0 %v1108
        %v1172 = vpop.f32.mrf.mxu0
        %v1173 = vadd.f32 %v1101, %v1172
        %1174 = vmatmul.f32.gmra.mxu0 %v1111
        %v1175 = vpop.f32.mrf.mxu0
        %v1176 = vadd.f32 %v1101, %v1175
        %1177 = vmatmul.f32.gmra.mxu0 %v1114
        %v1178 = vpop.f32.mrf.mxu0
        %v1179 = vadd.f32 %v1101, %v1178
        %1180 = vmatmul.f32.gmra.mxu0 %v1117
        %v1181 = vpop.f32.mrf.mxu0
        %v1182 = vadd.f32 %v1101, %v1181
        %1183 = vmatmul.f32.gmra.mxu0 %v1120
        %v1184 = vpop.f32.mrf.mxu0
        %v1185 = vadd.f32 %v1101, %v1184
        %1186 = vmatmul.f32.gmra.mxu0 %v1123
        %v1187 = vpop.f32.mrf.mxu0
        %v1188 = vadd.f32 %v1101, %v1187
        %1189 = vmatmul.f32.gmra.mxu0 %v1126
        %v1190 = vpop.f32.mrf.mxu0
        %v1191 = vadd.f32 %v1101, %v1190
        %1192 = vmatmul.f32.gmra.mxu0 %v1129
        %v1193 = vpop.f32.mrf.mxu0
        %v1194 = vadd.f32 %v1101, %v1193
        %1195 = vmatmul.f32.gmra.mxu0 %v1132
        %v1196 = vpop.f32.mrf.mxu0
        %v1197 = vadd.f32 %v1101, %v1196
        %1198 = vmatmul.f32.gmra.mxu0 %v1135
        %v1199 = vpop.f32.mrf.mxu0
        %v1200 = vadd.f32 %v1101, %v1199
        %1201 = vmatmul.f32.gmra.mxu0 %v1138
        %v1202 = vpop.f32.mrf.mxu0
        %v1203 = vadd.f32 %v1101, %v1202
        %1204 = vmatmul.f32.gmra.mxu0 %v1141
        %v1205 = vpop.f32.mrf.mxu0
        %v1206 = vadd.f32 %v1101, %v1205
        %1207 = vmatmul.f32.gmra.mxu0 %v1144
        %v1208 = vpop.f32.mrf.mxu0
        %v1209 = vadd.f32 %v1101, %v1208
        %1210 = vmatmul.f32.gmra.mxu0 %v1147
        %v1211 = vpop.f32.mrf.mxu0
        %v1212 = vadd.f32 %v1101, %v1211
        %1213 = vmatmul.f32.gmra.mxu0 %v1150
        %v1214 = vpop.f32.mrf.mxu0
        %v1215 = vadd.f32 %v1101, %v1214
        %1216 = vdwg.mxu0
        %v1217 = vmax.f32 %v1170, 0.0
        %v1218 = vmax.f32 %v1173, 0.0
        %v1219 = vmax.f32 %v1176, 0.0
        %v1220 = vmax.f32 %v1179, 0.0
        %v1221 = vmax.f32 %v1182, 0.0
        %v1222 = vmax.f32 %v1185, 0.0
        %v1223 = vmax.f32 %v1188, 0.0
        %v1224 = vmax.f32 %v1191, 0.0
        %v1225 = vmax.f32 %v1194, 0.0
        %v1226 = vmax.f32 %v1197, 0.0
        %v1227 = vmax.f32 %v1200, 0.0
        %v1228 = vmax.f32 %v1203, 0.0
        %v1229 = vmax.f32 %v1206, 0.0
        %v1230 = vmax.f32 %v1209, 0.0
        %v1231 = vmax.f32 %v1212, 0.0
        %v1232 = vmax.f32 %v1215, 0.0
        %v1233 = vld [vmem:[#allocation10] sm:$0xff]
        %v1234 = vld [vmem:[#allocation10 + $0x8] sm:$0xff]
        %v1235 = vld [vmem:[#allocation10 + $0x10] sm:$0xff]
        %v1236 = vld [vmem:[#allocation10 + $0x18] sm:$0xff]
        %v1237 = vld [vmem:[#allocation10 + $0x20] sm:$0xff]
        %v1238 = vld [vmem:[#allocation10 + $0x28] sm:$0xff]
        %v1239 = vld [vmem:[#allocation10 + $0x30] sm:$0xff]
        %v1240 = vld [vmem:[#allocation10 + $0x38] sm:$0xff]
        %v1241 = vld [vmem:[#allocation10 + $0x40] sm:$0xff]
        %v1242 = vld [vmem:[#allocation10 + $0x48] sm:$0xff]
        %v1243 = vld [vmem:[#allocation10 + $0x50] sm:$0xff]
        %v1244 = vld [vmem:[#allocation10 + $0x58] sm:$0xff]
        %v1245 = vld [vmem:[#allocation10 + $0x60] sm:$0xff]
        %v1246 = vld [vmem:[#allocation10 + $0x68] sm:$0xff]
        %v1247 = vld [vmem:[#allocation10 + $0x70] sm:$0xff]
        %v1248 = vld [vmem:[#allocation10 + $0x78] sm:$0xff]
        %v1249 = vld [vmem:[%s11] sm:$0x1]
        %v1251 = vperm.slane %v1249, 0
        %1253 = vmatpush.msra.mxu0 %v1248
        %1254 = vmatpush.msra.mxu0 %v1247
        %1255 = vmatpush.msra.mxu0 %v1246
        %1256 = vmatpush.msra.mxu0 %v1245
        %1257 = vmatpush.msra.mxu0 %v1244
        %1258 = vmatpush.msra.mxu0 %v1243
        %1259 = vmatpush.msra.mxu0 %v1242
        %1260 = vmatpush.msra.mxu0 %v1241
        %1261 = vmatpush.msra.mxu0 %v1240
        %1262 = vmatpush.msra.mxu0 %v1239
        %1263 = vmatpush.msra.mxu0 %v1238
        %1264 = vmatpush.msra.mxu0 %v1237
        %1265 = vmatpush.msra.mxu0 %v1236
        %1266 = vmatpush.msra.mxu0 %v1235
        %1267 = vmatpush.msra.mxu0 %v1234
        %1268 = vmatpush.msra.mxu0 %v1233
        %1269 = vmatmul.f32.gmra.mxu0 %v1217
        %v1270 = vpop.f32.mrf.mxu0
        %v1271 = vadd.f32 %v1251, %v1270
        %1272 = vmatmul.f32.gmra.mxu0 %v1218
        %v1273 = vpop.f32.mrf.mxu0
        %v1274 = vadd.f32 %v1251, %v1273
        %1275 = vmatmul.f32.gmra.mxu0 %v1219
        %v1276 = vpop.f32.mrf.mxu0
        %v1277 = vadd.f32 %v1251, %v1276
        %1278 = vmatmul.f32.gmra.mxu0 %v1220
        %v1279 = vpop.f32.mrf.mxu0
        %v1280 = vadd.f32 %v1251, %v1279
        %1281 = vmatmul.f32.gmra.mxu0 %v1221
        %v1282 = vpop.f32.mrf.mxu0
        %v1283 = vadd.f32 %v1251, %v1282
        %1284 = vmatmul.f32.gmra.mxu0 %v1222
        %v1285 = vpop.f32.mrf.mxu0
        %v1286 = vadd.f32 %v1251, %v1285
        %1287 = vmatmul.f32.gmra.mxu0 %v1223
        %v1288 = vpop.f32.mrf.mxu0
        %v1289 = vadd.f32 %v1251, %v1288
        %1290 = vmatmul.f32.gmra.mxu0 %v1224
        %v1291 = vpop.f32.mrf.mxu0
        %v1292 = vadd.f32 %v1251, %v1291
        %1293 = vmatmul.f32.gmra.mxu0 %v1225
        %v1294 = vpop.f32.mrf.mxu0
        %v1295 = vadd.f32 %v1251, %v1294
        %1296 = vmatmul.f32.gmra.mxu0 %v1226
        %v1297 = vpop.f32.mrf.mxu0
        %v1298 = vadd.f32 %v1251, %v1297
        %1299 = vmatmul.f32.gmra.mxu0 %v1227
        %v1300 = vpop.f32.mrf.mxu0
        %v1301 = vadd.f32 %v1251, %v1300
        %1302 = vmatmul.f32.gmra.mxu0 %v1228
        %v1303 = vpop.f32.mrf.mxu0
        %v1304 = vadd.f32 %v1251, %v1303
        %1305 = vmatmul.f32.gmra.mxu0 %v1229
        %v1306 = vpop.f32.mrf.mxu0
        %v1307 = vadd.f32 %v1251, %v1306
        %1308 = vmatmul.f32.gmra.mxu0 %v1230
        %v1309 = vpop.f32.mrf.mxu0
        %v1310 = vadd.f32 %v1251, %v1309
        %1311 = vmatmul.f32.gmra.mxu0 %v1231
        %v1312 = vpop.f32.mrf.mxu0
        %v1313 = vadd.f32 %v1251, %v1312
        %1314 = vmatmul.f32.gmra.mxu0 %v1232
        %v1315 = vpop.f32.mrf.mxu0
        %v1316 = vadd.f32 %v1251, %v1315
        %1317 = vdwg.mxu0
        %v1318 = vmax.f32 %v1271, 0.0
        %v1319 = vmax.f32 %v1274, 0.0
        %v1320 = vmax.f32 %v1277, 0.0
        %v1321 = vmax.f32 %v1280, 0.0
        %v1322 = vmax.f32 %v1283, 0.0
        %v1323 = vmax.f32 %v1286, 0.0
        %v1324 = vmax.f32 %v1289, 0.0
        %v1325 = vmax.f32 %v1292, 0.0
        %v1326 = vmax.f32 %v1295, 0.0
        %v1327 = vmax.f32 %v1298, 0.0
        %v1328 = vmax.f32 %v1301, 0.0
        %v1329 = vmax.f32 %v1304, 0.0
        %v1330 = vmax.f32 %v1307, 0.0
        %v1331 = vmax.f32 %v1310, 0.0
        %v1332 = vmax.f32 %v1313, 0.0
        %v1333 = vmax.f32 %v1316, 0.0
        %v1334 = vld [vmem:[#allocation11] sm:$0xff]
        %v1335 = vld [vmem:[#allocation11 + $0x8] sm:$0xff]
        %v1336 = vld [vmem:[#allocation11 + $0x10] sm:$0xff]
        %v1337 = vld [vmem:[#allocation11 + $0x18] sm:$0xff]
        %v1338 = vld [vmem:[#allocation11 + $0x20] sm:$0xff]
        %v1339 = vld [vmem:[#allocation11 + $0x28] sm:$0xff]
        %v1340 = vld [vmem:[#allocation11 + $0x30] sm:$0xff]
        %v1341 = vld [vmem:[#allocation11 + $0x38] sm:$0xff]
        %v1342 = vld [vmem:[#allocation11 + $0x40] sm:$0xff]
        %v1343 = vld [vmem:[#allocation11 + $0x48] sm:$0xff]
        %v1344 = vld [vmem:[#allocation11 + $0x50] sm:$0xff]
        %v1345 = vld [vmem:[#allocation11 + $0x58] sm:$0xff]
        %v1346 = vld [vmem:[#allocation11 + $0x60] sm:$0xff]
        %v1347 = vld [vmem:[#allocation11 + $0x68] sm:$0xff]
        %v1348 = vld [vmem:[#allocation11 + $0x70] sm:$0xff]
        %v1349 = vld [vmem:[#allocation11 + $0x78] sm:$0xff]
        %v1350 = vld [vmem:[%s13] sm:$0x1]
        %v1352 = vperm.slane %v1350, 0
        %1354 = vmatpush.msra.mxu0 %v1349
        %1355 = vmatpush.msra.mxu0 %v1348
        %1356 = vmatpush.msra.mxu0 %v1347
        %1357 = vmatpush.msra.mxu0 %v1346
        %1358 = vmatpush.msra.mxu0 %v1345
        %1359 = vmatpush.msra.mxu0 %v1344
        %1360 = vmatpush.msra.mxu0 %v1343
        %1361 = vmatpush.msra.mxu0 %v1342
        %1362 = vmatpush.msra.mxu0 %v1341
        %1363 = vmatpush.msra.mxu0 %v1340
        %1364 = vmatpush.msra.mxu0 %v1339
        %1365 = vmatpush.msra.mxu0 %v1338
        %1366 = vmatpush.msra.mxu0 %v1337
        %1367 = vmatpush.msra.mxu0 %v1336
        %1368 = vmatpush.msra.mxu0 %v1335
        %1369 = vmatpush.msra.mxu0 %v1334
        %1370 = vmatmul.f32.gmra.mxu0 %v1318
        %v1371 = vpop.f32.mrf.mxu0
        %v1372 = vadd.f32 %v1352, %v1371
        %1373 = vmatmul.f32.gmra.mxu0 %v1319
        %v1374 = vpop.f32.mrf.mxu0
        %v1375 = vadd.f32 %v1352, %v1374
        %1376 = vmatmul.f32.gmra.mxu0 %v1320
        %v1377 = vpop.f32.mrf.mxu0
        %v1378 = vadd.f32 %v1352, %v1377
        %1379 = vmatmul.f32.gmra.mxu0 %v1321
        %v1380 = vpop.f32.mrf.mxu0
        %v1381 = vadd.f32 %v1352, %v1380
        %1382 = vmatmul.f32.gmra.mxu0 %v1322
        %v1383 = vpop.f32.mrf.mxu0
        %v1384 = vadd.f32 %v1352, %v1383
        %1385 = vmatmul.f32.gmra.mxu0 %v1323
        %v1386 = vpop.f32.mrf.mxu0
        %v1387 = vadd.f32 %v1352, %v1386
        %1388 = vmatmul.f32.gmra.mxu0 %v1324
        %v1389 = vpop.f32.mrf.mxu0
        %v1390 = vadd.f32 %v1352, %v1389
        %1391 = vmatmul.f32.gmra.mxu0 %v1325
        %v1392 = vpop.f32.mrf.mxu0
        %v1393 = vadd.f32 %v1352, %v1392
        %1394 = vmatmul.f32.gmra.mxu0 %v1326
        %v1395 = vpop.f32.mrf.mxu0
        %v1396 = vadd.f32 %v1352, %v1395
        %1397 = vmatmul.f32.gmra.mxu0 %v1327
        %v1398 = vpop.f32.mrf.mxu0
        %v1399 = vadd.f32 %v1352, %v1398
        %1400 = vmatmul.f32.gmra.mxu0 %v1328
        %v1401 = vpop.f32.mrf.mxu0
        %v1402 = vadd.f32 %v1352, %v1401
        %1403 = vmatmul.f32.gmra.mxu0 %v1329
        %v1404 = vpop.f32.mrf.mxu0
        %v1405 = vadd.f32 %v1352, %v1404
        %1406 = vmatmul.f32.gmra.mxu0 %v1330
        %v1407 = vpop.f32.mrf.mxu0
        %v1408 = vadd.f32 %v1352, %v1407
        %1409 = vmatmul.f32.gmra.mxu0 %v1331
        %v1410 = vpop.f32.mrf.mxu0
        %v1411 = vadd.f32 %v1352, %v1410
        %1412 = vmatmul.f32.gmra.mxu0 %v1332
        %v1413 = vpop.f32.mrf.mxu0
        %v1414 = vadd.f32 %v1352, %v1413
        %1415 = vmatmul.f32.gmra.mxu0 %v1333
        %v1416 = vpop.f32.mrf.mxu0
        %v1417 = vadd.f32 %v1352, %v1416
        %1418 = vdwg.mxu0
        %v1419 = vxor.u32 %v1372, 2147483648
        %v1420 = vxor.u32 %v1375, 2147483648
        %v1421 = vxor.u32 %v1378, 2147483648
        %v1422 = vxor.u32 %v1381, 2147483648
        %v1423 = vxor.u32 %v1384, 2147483648
        %v1424 = vxor.u32 %v1387, 2147483648
        %v1425 = vxor.u32 %v1390, 2147483648
        %v1426 = vxor.u32 %v1393, 2147483648
        %v1427 = vxor.u32 %v1396, 2147483648
        %v1428 = vxor.u32 %v1399, 2147483648
        %v1429 = vxor.u32 %v1402, 2147483648
        %v1430 = vxor.u32 %v1405, 2147483648
        %v1431 = vxor.u32 %v1408, 2147483648
        %v1432 = vxor.u32 %v1411, 2147483648
        %v1433 = vxor.u32 %v1414, 2147483648
        %v1434 = vxor.u32 %v1417, 2147483648
        %v1435 = vmul.f32 %v1419, 1.442695
        %v1436 = vpow.pop %v1435
        %v1437 = vmul.f32 %v1420, 1.442695
        %v1438 = vpow.pop %v1437
        %v1439 = vmul.f32 %v1421, 1.442695
        %v1440 = vpow.pop %v1439
        %v1441 = vmul.f32 %v1422, 1.442695
        %v1442 = vpow.pop %v1441
        %v1443 = vmul.f32 %v1423, 1.442695
        %v1444 = vpow.pop %v1443
        %v1445 = vmul.f32 %v1424, 1.442695
        %v1446 = vpow.pop %v1445
        %v1447 = vmul.f32 %v1425, 1.442695
        %v1448 = vpow.pop %v1447
        %v1449 = vmul.f32 %v1426, 1.442695
        %v1450 = vpow.pop %v1449
        %v1451 = vmul.f32 %v1427, 1.442695
        %v1452 = vpow.pop %v1451
        %v1453 = vmul.f32 %v1428, 1.442695
        %v1454 = vpow.pop %v1453
        %v1455 = vmul.f32 %v1429, 1.442695
        %v1456 = vpow.pop %v1455
        %v1457 = vmul.f32 %v1430, 1.442695
        %v1458 = vpow.pop %v1457
        %v1459 = vmul.f32 %v1431, 1.442695
        %v1460 = vpow.pop %v1459
        %v1461 = vmul.f32 %v1432, 1.442695
        %v1462 = vpow.pop %v1461
        %v1463 = vmul.f32 %v1433, 1.442695
        %v1464 = vpow.pop %v1463
        %v1465 = vmul.f32 %v1434, 1.442695
        %v1466 = vpow.pop %v1465
        %v1467 = vadd.f32 %v1436, 1.0
        %v1468 = vadd.f32 %v1438, 1.0
        %v1469 = vadd.f32 %v1440, 1.0
        %v1470 = vadd.f32 %v1442, 1.0
        %v1471 = vadd.f32 %v1444, 1.0
        %v1472 = vadd.f32 %v1446, 1.0
        %v1473 = vadd.f32 %v1448, 1.0
        %v1474 = vadd.f32 %v1450, 1.0
        %v1475 = vadd.f32 %v1452, 1.0
        %v1476 = vadd.f32 %v1454, 1.0
        %v1477 = vadd.f32 %v1456, 1.0
        %v1478 = vadd.f32 %v1458, 1.0
        %v1479 = vadd.f32 %v1460, 1.0
        %v1480 = vadd.f32 %v1462, 1.0
        %v1481 = vadd.f32 %v1464, 1.0
        %v1482 = vadd.f32 %v1466, 1.0
        %v1483 = vrcp.pop %v1467
        %v1484 = vmul.f32 %v1467, %v1483
        %v1485 = vsub.f32 1.0, %v1484
        %v1486 = vmul.f32 %v1483, %v1485
        %v1487 = vadd.f32 %v1483, %v1486
        %vm1488 = vweird.f32 %v1467
        %vm1489 = vweird.f32 %v1483
        %vm1490 = vmor %vm1488, %vm1489
        %v1491 = vsel %vm1490, %v1483, %v1487
        %v1492 = vand.u32 2147483647, %v1467
        %vm1493 = vcmp.eq.f32.partialorder %v1492, 8.507059e+37
        %v1494 = vand.u32 %v1467, 2147483648
        %v1495 = vor.u32 1.1754944e-38, %v1494
        %v1496 = vsel %vm1493, %v1495, %v1491
        %v1497 = vmul.f32 1.0, %v1496
        %v1498 = vrcp.pop %v1468
        %v1499 = vmul.f32 %v1468, %v1498
        %v1500 = vsub.f32 1.0, %v1499
        %v1501 = vmul.f32 %v1498, %v1500
        %v1502 = vadd.f32 %v1498, %v1501
        %vm1503 = vweird.f32 %v1468
        %vm1504 = vweird.f32 %v1498
        %vm1505 = vmor %vm1503, %vm1504
        %v1506 = vsel %vm1505, %v1498, %v1502
        %v1507 = vand.u32 2147483647, %v1468
        %vm1508 = vcmp.eq.f32.partialorder %v1507, 8.507059e+37
        %v1509 = vand.u32 %v1468, 2147483648
        %v1510 = vor.u32 1.1754944e-38, %v1509
        %v1511 = vsel %vm1508, %v1510, %v1506
        %v1512 = vmul.f32 1.0, %v1511
        %v1513 = vrcp.pop %v1469
        %v1514 = vmul.f32 %v1469, %v1513
        %v1515 = vsub.f32 1.0, %v1514
        %v1516 = vmul.f32 %v1513, %v1515
        %v1517 = vadd.f32 %v1513, %v1516
        %vm1518 = vweird.f32 %v1469
        %vm1519 = vweird.f32 %v1513
        %vm1520 = vmor %vm1518, %vm1519
        %v1521 = vsel %vm1520, %v1513, %v1517
        %v1522 = vand.u32 2147483647, %v1469
        %vm1523 = vcmp.eq.f32.partialorder %v1522, 8.507059e+37
        %v1524 = vand.u32 %v1469, 2147483648
        %v1525 = vor.u32 1.1754944e-38, %v1524
        %v1526 = vsel %vm1523, %v1525, %v1521
        %v1527 = vmul.f32 1.0, %v1526
        %v1528 = vrcp.pop %v1470
        %v1529 = vmul.f32 %v1470, %v1528
        %v1530 = vsub.f32 1.0, %v1529
        %v1531 = vmul.f32 %v1528, %v1530
        %v1532 = vadd.f32 %v1528, %v1531
        %vm1533 = vweird.f32 %v1470
        %vm1534 = vweird.f32 %v1528
        %vm1535 = vmor %vm1533, %vm1534
        %v1536 = vsel %vm1535, %v1528, %v1532
        %v1537 = vand.u32 2147483647, %v1470
        %vm1538 = vcmp.eq.f32.partialorder %v1537, 8.507059e+37
        %v1539 = vand.u32 %v1470, 2147483648
        %v1540 = vor.u32 1.1754944e-38, %v1539
        %v1541 = vsel %vm1538, %v1540, %v1536
        %v1542 = vmul.f32 1.0, %v1541
        %v1543 = vrcp.pop %v1471
        %v1544 = vmul.f32 %v1471, %v1543
        %v1545 = vsub.f32 1.0, %v1544
        %v1546 = vmul.f32 %v1543, %v1545
        %v1547 = vadd.f32 %v1543, %v1546
        %vm1548 = vweird.f32 %v1471
        %vm1549 = vweird.f32 %v1543
        %vm1550 = vmor %vm1548, %vm1549
        %v1551 = vsel %vm1550, %v1543, %v1547
        %v1552 = vand.u32 2147483647, %v1471
        %vm1553 = vcmp.eq.f32.partialorder %v1552, 8.507059e+37
        %v1554 = vand.u32 %v1471, 2147483648
        %v1555 = vor.u32 1.1754944e-38, %v1554
        %v1556 = vsel %vm1553, %v1555, %v1551
        %v1557 = vmul.f32 1.0, %v1556
        %v1558 = vrcp.pop %v1472
        %v1559 = vmul.f32 %v1472, %v1558
        %v1560 = vsub.f32 1.0, %v1559
        %v1561 = vmul.f32 %v1558, %v1560
        %v1562 = vadd.f32 %v1558, %v1561
        %vm1563 = vweird.f32 %v1472
        %vm1564 = vweird.f32 %v1558
        %vm1565 = vmor %vm1563, %vm1564
        %v1566 = vsel %vm1565, %v1558, %v1562
        %v1567 = vand.u32 2147483647, %v1472
        %vm1568 = vcmp.eq.f32.partialorder %v1567, 8.507059e+37
        %v1569 = vand.u32 %v1472, 2147483648
        %v1570 = vor.u32 1.1754944e-38, %v1569
        %v1571 = vsel %vm1568, %v1570, %v1566
        %v1572 = vmul.f32 1.0, %v1571
        %v1573 = vrcp.pop %v1473
        %v1574 = vmul.f32 %v1473, %v1573
        %v1575 = vsub.f32 1.0, %v1574
        %v1576 = vmul.f32 %v1573, %v1575
        %v1577 = vadd.f32 %v1573, %v1576
        %vm1578 = vweird.f32 %v1473
        %vm1579 = vweird.f32 %v1573
        %vm1580 = vmor %vm1578, %vm1579
        %v1581 = vsel %vm1580, %v1573, %v1577
        %v1582 = vand.u32 2147483647, %v1473
        %vm1583 = vcmp.eq.f32.partialorder %v1582, 8.507059e+37
        %v1584 = vand.u32 %v1473, 2147483648
        %v1585 = vor.u32 1.1754944e-38, %v1584
        %v1586 = vsel %vm1583, %v1585, %v1581
        %v1587 = vmul.f32 1.0, %v1586
        %v1588 = vrcp.pop %v1474
        %v1589 = vmul.f32 %v1474, %v1588
        %v1590 = vsub.f32 1.0, %v1589
        %v1591 = vmul.f32 %v1588, %v1590
        %v1592 = vadd.f32 %v1588, %v1591
        %vm1593 = vweird.f32 %v1474
        %vm1594 = vweird.f32 %v1588
        %vm1595 = vmor %vm1593, %vm1594
        %v1596 = vsel %vm1595, %v1588, %v1592
        %v1597 = vand.u32 2147483647, %v1474
        %vm1598 = vcmp.eq.f32.partialorder %v1597, 8.507059e+37
        %v1599 = vand.u32 %v1474, 2147483648
        %v1600 = vor.u32 1.1754944e-38, %v1599
        %v1601 = vsel %vm1598, %v1600, %v1596
        %v1602 = vmul.f32 1.0, %v1601
        %v1603 = vrcp.pop %v1475
        %v1604 = vmul.f32 %v1475, %v1603
        %v1605 = vsub.f32 1.0, %v1604
        %v1606 = vmul.f32 %v1603, %v1605
        %v1607 = vadd.f32 %v1603, %v1606
        %vm1608 = vweird.f32 %v1475
        %vm1609 = vweird.f32 %v1603
        %vm1610 = vmor %vm1608, %vm1609
        %v1611 = vsel %vm1610, %v1603, %v1607
        %v1612 = vand.u32 2147483647, %v1475
        %vm1613 = vcmp.eq.f32.partialorder %v1612, 8.507059e+37
        %v1614 = vand.u32 %v1475, 2147483648
        %v1615 = vor.u32 1.1754944e-38, %v1614
        %v1616 = vsel %vm1613, %v1615, %v1611
        %v1617 = vmul.f32 1.0, %v1616
        %v1618 = vrcp.pop %v1476
        %v1619 = vmul.f32 %v1476, %v1618
        %v1620 = vsub.f32 1.0, %v1619
        %v1621 = vmul.f32 %v1618, %v1620
        %v1622 = vadd.f32 %v1618, %v1621
        %vm1623 = vweird.f32 %v1476
        %vm1624 = vweird.f32 %v1618
        %vm1625 = vmor %vm1623, %vm1624
        %v1626 = vsel %vm1625, %v1618, %v1622
        %v1627 = vand.u32 2147483647, %v1476
        %vm1628 = vcmp.eq.f32.partialorder %v1627, 8.507059e+37
        %v1629 = vand.u32 %v1476, 2147483648
        %v1630 = vor.u32 1.1754944e-38, %v1629
        %v1631 = vsel %vm1628, %v1630, %v1626
        %v1632 = vmul.f32 1.0, %v1631
        %v1633 = vrcp.pop %v1477
        %v1634 = vmul.f32 %v1477, %v1633
        %v1635 = vsub.f32 1.0, %v1634
        %v1636 = vmul.f32 %v1633, %v1635
        %v1637 = vadd.f32 %v1633, %v1636
        %vm1638 = vweird.f32 %v1477
        %vm1639 = vweird.f32 %v1633
        %vm1640 = vmor %vm1638, %vm1639
        %v1641 = vsel %vm1640, %v1633, %v1637
        %v1642 = vand.u32 2147483647, %v1477
        %vm1643 = vcmp.eq.f32.partialorder %v1642, 8.507059e+37
        %v1644 = vand.u32 %v1477, 2147483648
        %v1645 = vor.u32 1.1754944e-38, %v1644
        %v1646 = vsel %vm1643, %v1645, %v1641
        %v1647 = vmul.f32 1.0, %v1646
        %v1648 = vrcp.pop %v1478
        %v1649 = vmul.f32 %v1478, %v1648
        %v1650 = vsub.f32 1.0, %v1649
        %v1651 = vmul.f32 %v1648, %v1650
        %v1652 = vadd.f32 %v1648, %v1651
        %vm1653 = vweird.f32 %v1478
        %vm1654 = vweird.f32 %v1648
        %vm1655 = vmor %vm1653, %vm1654
        %v1656 = vsel %vm1655, %v1648, %v1652
        %v1657 = vand.u32 2147483647, %v1478
        %vm1658 = vcmp.eq.f32.partialorder %v1657, 8.507059e+37
        %v1659 = vand.u32 %v1478, 2147483648
        %v1660 = vor.u32 1.1754944e-38, %v1659
        %v1661 = vsel %vm1658, %v1660, %v1656
        %v1662 = vmul.f32 1.0, %v1661
        %v1663 = vrcp.pop %v1479
        %v1664 = vmul.f32 %v1479, %v1663
        %v1665 = vsub.f32 1.0, %v1664
        %v1666 = vmul.f32 %v1663, %v1665
        %v1667 = vadd.f32 %v1663, %v1666
        %vm1668 = vweird.f32 %v1479
        %vm1669 = vweird.f32 %v1663
        %vm1670 = vmor %vm1668, %vm1669
        %v1671 = vsel %vm1670, %v1663, %v1667
        %v1672 = vand.u32 2147483647, %v1479
        %vm1673 = vcmp.eq.f32.partialorder %v1672, 8.507059e+37
        %v1674 = vand.u32 %v1479, 2147483648
        %v1675 = vor.u32 1.1754944e-38, %v1674
        %v1676 = vsel %vm1673, %v1675, %v1671
        %v1677 = vmul.f32 1.0, %v1676
        %v1678 = vrcp.pop %v1480
        %v1679 = vmul.f32 %v1480, %v1678
        %v1680 = vsub.f32 1.0, %v1679
        %v1681 = vmul.f32 %v1678, %v1680
        %v1682 = vadd.f32 %v1678, %v1681
        %vm1683 = vweird.f32 %v1480
        %vm1684 = vweird.f32 %v1678
        %vm1685 = vmor %vm1683, %vm1684
        %v1686 = vsel %vm1685, %v1678, %v1682
        %v1687 = vand.u32 2147483647, %v1480
        %vm1688 = vcmp.eq.f32.partialorder %v1687, 8.507059e+37
        %v1689 = vand.u32 %v1480, 2147483648
        %v1690 = vor.u32 1.1754944e-38, %v1689
        %v1691 = vsel %vm1688, %v1690, %v1686
        %v1692 = vmul.f32 1.0, %v1691
        %v1693 = vrcp.pop %v1481
        %v1694 = vmul.f32 %v1481, %v1693
        %v1695 = vsub.f32 1.0, %v1694
        %v1696 = vmul.f32 %v1693, %v1695
        %v1697 = vadd.f32 %v1693, %v1696
        %vm1698 = vweird.f32 %v1481
        %vm1699 = vweird.f32 %v1693
        %vm1700 = vmor %vm1698, %vm1699
        %v1701 = vsel %vm1700, %v1693, %v1697
        %v1702 = vand.u32 2147483647, %v1481
        %vm1703 = vcmp.eq.f32.partialorder %v1702, 8.507059e+37
        %v1704 = vand.u32 %v1481, 2147483648
        %v1705 = vor.u32 1.1754944e-38, %v1704
        %v1706 = vsel %vm1703, %v1705, %v1701
        %v1707 = vmul.f32 1.0, %v1706
        %v1708 = vrcp.pop %v1482
        %v1709 = vmul.f32 %v1482, %v1708
        %v1710 = vsub.f32 1.0, %v1709
        %v1711 = vmul.f32 %v1708, %v1710
        %v1712 = vadd.f32 %v1708, %v1711
        %vm1713 = vweird.f32 %v1482
        %vm1714 = vweird.f32 %v1708
        %vm1715 = vmor %vm1713, %vm1714
        %v1716 = vsel %vm1715, %v1708, %v1712
        %v1717 = vand.u32 2147483647, %v1482
        %vm1718 = vcmp.eq.f32.partialorder %v1717, 8.507059e+37
        %v1719 = vand.u32 %v1482, 2147483648
        %v1720 = vor.u32 1.1754944e-38, %v1719
        %v1721 = vsel %vm1718, %v1720, %v1716
        %v1722 = vmul.f32 1.0, %v1721
        %1723 = vst [vmem:[%s606] sm:$0xff] %v1497
        %1724 = vst [vmem:[%s606 + $0x8] sm:$0xff] %v1512
        %1725 = vst [vmem:[%s606 + $0x10] sm:$0xff] %v1527
        %1726 = vst [vmem:[%s606 + $0x18] sm:$0xff] %v1542
        %1727 = vst [vmem:[%s606 + $0x20] sm:$0xff] %v1557
        %1728 = vst [vmem:[%s606 + $0x28] sm:$0xff] %v1572
        %1729 = vst [vmem:[%s606 + $0x30] sm:$0xff] %v1587
        %1730 = vst [vmem:[%s606 + $0x38] sm:$0xff] %v1602
        %1731 = vst [vmem:[%s606 + $0x40] sm:$0xff] %v1617
        %1732 = vst [vmem:[%s606 + $0x48] sm:$0xff] %v1632
        %1733 = vst [vmem:[%s606 + $0x50] sm:$0xff] %v1647
        %1734 = vst [vmem:[%s606 + $0x58] sm:$0xff] %v1662
        %1735 = vst [vmem:[%s606 + $0x60] sm:$0xff] %v1677
        %1736 = vst [vmem:[%s606 + $0x68] sm:$0xff] %v1692
        %1737 = vst [vmem:[%s606 + $0x70] sm:$0xff] %v1707
        %1738 = vst [vmem:[%s606 + $0x78] sm:$0xff] %v1722
        %1739 = vst [vmem:[%s613] sm:$0xff] %v884
        %1740 = vst [vmem:[%s613 + $0x8] sm:$0xff] %v887
        %1741 = vst [vmem:[%s613 + $0x10] sm:$0xff] %v890
        %1742 = vst [vmem:[%s613 + $0x18] sm:$0xff] %v893
        %1743 = vst [vmem:[%s613 + $0x20] sm:$0xff] %v896
        %1744 = vst [vmem:[%s613 + $0x28] sm:$0xff] %v899
        %1745 = vst [vmem:[%s613 + $0x30] sm:$0xff] %v902
        %1746 = vst [vmem:[%s613 + $0x38] sm:$0xff] %v905
        %1747 = vst [vmem:[%s613 + $0x40] sm:$0xff] %v908
        %1748 = vst [vmem:[%s613 + $0x48] sm:$0xff] %v911
        %1749 = vst [vmem:[%s613 + $0x50] sm:$0xff] %v914
        %1750 = vst [vmem:[%s613 + $0x58] sm:$0xff] %v917
        %1751 = vst [vmem:[%s613 + $0x60] sm:$0xff] %v920
        %1752 = vst [vmem:[%s613 + $0x68] sm:$0xff] %v923
        %1753 = vst [vmem:[%s613 + $0x70] sm:$0xff] %v926
        %1754 = vst [vmem:[%s613 + $0x78] sm:$0xff] %v929
        %s1755 = sand.u32 %s349, 1
        %s1756 = scalar_lea.sflag [#allocation4], %s1755
        %s1757 = sand.u32 %s349, 1
        %s1758 = smul.addr %s1757, 128
        %s1759 = scalar_lea.vmem [#allocation13], %s1758
        %s1760 = sand.u32 %s375, 1
        %s1761 = scalar_lea.sflag [#allocation15], %s1760
        %s1762 = sand.u32 %s375, 1
        %s1763 = smul.addr %s1762, 128
        %s1764 = scalar_lea.vmem [#allocation14], %s1763
        // Predicated region
        $region101: #{tpu_custom_call.1} parent=75 // pred_check
          %p1765 = pneg %p359
        $region102: #{tpu_custom_call.1} parent=75 // pred_check_branch
          %1767 = sbr.rel (%p1765) target = $region104
        $region103: #{tpu_custom_call.1} parent=75 // pred_region
          %s1768 = smul.u32 16, %s37
          %1770 = vsyncadd %s1756, 0
          %s1771 = smul.addr %s1768, 8
          %s1772 = scalar_lea.hbm %s14, %s1771
          %s1773 = sshll.u32 %s1759, 4
          %s1774 = int_to_ptr.vmem [resolvable:$true] %s1773
          %s1775 = sshll.u32 %s1772, 4
          %s1776 = int_to_ptr.hbm [resolvable:$true] %s1775
          %1781 = dma.vmem_to_hbm [thread:$0]  %s1774, 2048, %s1776, %s1756, 128, 128, 8
        $region104: #{tpu_custom_call.1} parent=75 // pred_fallthru
          _
        // Predicated region
        $region105: #{tpu_custom_call.1} parent=75 // pred_check
          %p1782 = pneg %p385
        $region106: #{tpu_custom_call.1} parent=75 // pred_check_branch
          %1784 = sbr.rel (%p1782) target = $region108
        $region107: #{tpu_custom_call.1} parent=75 // pred_region
          %s1785 = smul.u32 16, %s37
          %1787 = vsyncadd %s1761, 0
          %s1788 = smul.addr %s1785, 8
          %s1789 = scalar_lea.hbm %s15, %s1788
          %s1790 = sshll.u32 %s1764, 4
          %s1791 = int_to_ptr.vmem [resolvable:$true] %s1790
          %s1792 = sshll.u32 %s1789, 4
          %s1793 = int_to_ptr.hbm [resolvable:$true] %s1792
          %1798 = dma.vmem_to_hbm [thread:$0]  %s1791, 2048, %s1793, %s1761, 128, 128, 8
        $region108: #{tpu_custom_call.1} parent=75 // pred_fallthru
          _
      $region76: #{tpu_custom_call.1} parent=5 // pred_fallthru
        _
      %p1799 = scmp.le.s32.totalorder 2, %s32
      // Predicated region
      $region109: #{tpu_custom_call.1} parent=5 // pred_check
        %p1800 = pneg %p1799
      $region110: #{tpu_custom_call.1} parent=5 // pred_check_branch
        %1802 = sbr.rel (%p1800) target = $region112
      $region111: #{tpu_custom_call.1} parent=5 // pred_region
        %s1803 = ssub.s32 %s32, 2
        // Predicated region
        $region113: #{tpu_custom_call.1} parent=111 // pred_check
          %p1804 = pneg %p365
        $region114: #{tpu_custom_call.1} parent=111 // pred_check_branch
          %1806 = sbr.rel (%p1804) target = $region116
        $region115: #{tpu_custom_call.1} parent=111 // pred_region
          %s1807 = sand.u32 %s350, 1
          %s1808 = scalar_lea.sflag [#allocation4], %s1807
          %s1809 = sand.u32 %s350, 1
          %s1810 = smul.addr %s1809, 128
          %s1811 = scalar_lea.vmem [#allocation13], %s1810
          %1813 = dma.done %s1808, 2048
        $region116: #{tpu_custom_call.1} parent=111 // pred_fallthru
          _
        // Predicated region
        $region117: #{tpu_custom_call.1} parent=111 // pred_check
          %p1814 = pneg %p391
        $region118: #{tpu_custom_call.1} parent=111 // pred_check_branch
          %1816 = sbr.rel (%p1814) target = $region120
        $region119: #{tpu_custom_call.1} parent=111 // pred_region
          %s1817 = sand.u32 %s376, 1
          %s1818 = scalar_lea.sflag [#allocation15], %s1817
          %s1819 = sand.u32 %s376, 1
          %s1820 = smul.addr %s1819, 128
          %s1821 = scalar_lea.vmem [#allocation14], %s1820
          %1823 = dma.done %s1818, 2048
        $region120: #{tpu_custom_call.1} parent=111 // pred_fallthru
          _
      $region112: #{tpu_custom_call.1} parent=5 // pred_fallthru
        _
    $region6: #{tpu_custom_call.1} parent=1 // loop_footer
      %s36 = sadd.s32 1, %s32
    $region7: #{tpu_custom_call.1} parent=1 // loop_footer_branch
      %31 = sbr.rel target = $region3
    $region8: #{tpu_custom_call.1} parent=1 // loop_exit
      _
    %1824 = vsyncpa [#allocation3], 1
    %s1825 = scalar_lea.sflag [#allocation3], 1
    %1826 = vsyncpa %s1825, 1
    %1827 = vsyncpa [#allocation6], 1
    %1828 = vsyncpa [#allocation9], 1
    %1829 = vsyncpa [#allocation12], 1
    %1830 = vsyncpa [#allocation4], 1
    %s1831 = scalar_lea.sflag [#allocation4], 1
    %1832 = vsyncpa %s1831, 1
    %1833 = vsyncpa [#allocation15], 1
    %s1834 = scalar_lea.sflag [#allocation15], 1
    %1835 = vsyncpa %s1834, 1

</llo_original>
